<compile_context>
chip_gen: v5e
topology: v5e:2x2
jax: 0.10.0
libtpu: 0.0.40
codegen_flags: <defaults>
</compile_context>

<pallas_src>
import jax
import jax.numpy as jnp
from jax.experimental import pallas as pl
from jax.experimental.pallas import tpu as pltpu

BN_EPS = 1e-5

NUM_ATOM_FEATS = 2
NUM_BOND_FEATS = 2
ATOM_VOCAB = (10, 5)
BOND_VOCAB = (6, 4)


# ----------------------------------------------------------------------------
# Fused multi-layer GINE kernel (grid axis = layer, sequential)
# ----------------------------------------------------------------------------
def fused_gine_kernel(
    x_ref,      # [N, D]   atom-encoder node embeddings (resident)
    ssrc_ref,   # [E, N]   one-hot gather matrix  (resident, layer-invariant)
    sdst_ref,   # [N, E]   one-hot scatter matrix (resident, layer-invariant)
    eemb_ref,   # [E, D]   this layer's bond embeddings (streamed per layer)
    eps_ref,    # [L, 1]   per-layer GINE eps (SMEM)
    w1_ref,     # [D, 2D]  mlp Linear1 weight (in, out)
    p1_ref,     # [3, 2D]  packed (b1, gamma1, beta1)
    w2_ref,     # [2D, D]  mlp Linear2 weight
    p2_ref,     # [3, D]   packed (b2, gamma2, beta2)
    out_ref,    # [N, D]   resident output; doubles as the h carry across layers
):
    layer = pl.program_id(0)
    is_last = layer == pl.num_programs(0) - 1

    @pl.when(layer == 0)
    def _():
        out_ref[...] = x_ref[...]

    h = out_ref[...]
    n = h.shape[0]
    inv_n = 1.0 / n
    ones_row = jnp.ones((1, n), jnp.float32)

    # ---- message passing on the MXU:
    #   msg[e] = relu(h[src[e]] + eemb[e]);  agg[v] = sum_{e: dst[e]==v} msg[e]
    msg = jnp.maximum(
        jnp.dot(ssrc_ref[...], h, preferred_element_type=jnp.float32)
        + eemb_ref[...],
        0.0,
    )
    agg = jnp.dot(sdst_ref[...], msg, preferred_element_type=jnp.float32)

    # ---- GINE update: mlp((1 + eps) * h + agg)
    pre = (1.0 + eps_ref[layer, 0]) * h + agg

    # Linear(D -> 2D) + bias
    z = jnp.dot(pre, w1_ref[...], preferred_element_type=jnp.float32) + p1_ref[0:1, :]
    # BatchNorm1d(2D): training-mode batch stats, sums computed on the MXU,
    # two-pass (centered) variance for numerical safety.
    m1 = jnp.dot(ones_row, z, preferred_element_type=jnp.float32) * inv_n
    d1 = z - m1
    v1 = jnp.dot(ones_row, d1 * d1, preferred_element_type=jnp.float32) * inv_n
    z = d1 * jax.lax.rsqrt(v1 + BN_EPS) * p1_ref[1:2, :] + p1_ref[2:3, :]
    z = jnp.maximum(z, 0.0)

    # Linear(2D -> D) + bias
    z = jnp.dot(z, w2_ref[...], preferred_element_type=jnp.float32) + p2_ref[0:1, :]
    # outer BatchNorm1d(D)
    m2 = jnp.dot(ones_row, z, preferred_element_type=jnp.float32) * inv_n
    d2 = z - m2
    v2 = jnp.dot(ones_row, d2 * d2, preferred_element_type=jnp.float32) * inv_n
    z = d2 * jax.lax.rsqrt(v2 + BN_EPS) * p2_ref[1:2, :] + p2_ref[2:3, :]

    # ReLU on all but the last layer (dropout p=0 == identity); out_ref is the
    # h carry read back at the next layer iteration.
    @pl.when(jnp.logical_not(is_last))
    def _():
        out_ref[...] = jnp.maximum(z, 0.0)

    @pl.when(is_last)
    def _():
        out_ref[...] = z


def fused_gnn(h0, s_src, s_dst, eemb, eps, w1, p1, w2, p2):
    """All GNN layers in one pallas_call; h stays resident in the output block."""
    n, d = h0.shape
    num_layer, num_edges, _ = eemb.shape
    d2 = 2 * d

    def resident(shape):
        return pl.BlockSpec(shape, lambda l: (0,) * len(shape))

    def per_layer(shape):
        return pl.BlockSpec((None,) + shape, lambda l: (l,) + (0,) * len(shape))

    grid_spec = pltpu.PrefetchScalarGridSpec(
        num_scalar_prefetch=0,
        grid=(num_layer,),
        in_specs=[
            resident((n, d)),                                   # x (atom emb)
            resident((num_edges, n)),                           # S_src  [E, N]
            resident((n, num_edges)),                           # S_dst  [N, E]
            per_layer((num_edges, d)),                          # bond embeddings
            pl.BlockSpec(memory_space=pltpu.MemorySpace.SMEM),  # eps [L, 1]
            per_layer((d, d2)),                                 # w1
            per_layer((3, d2)),                                 # (b1, g1, be1)
            per_layer((d2, d)),                                 # w2
            per_layer((3, d)),                                  # (b2, g2, be2)
        ],
        out_specs=pl.BlockSpec((n, d), lambda l: (0, 0)),       # resident out / h carry
    )

    flops_per_layer = (
        2 * num_edges * n * d          # gather matmul
        + 2 * n * num_edges * d        # scatter matmul
        + 2 * num_edges * d            # msg add + relu
        + 3 * n * d                    # pre = (1+eps)*h + agg
        + 2 * n * d * d2 + n * d2      # linear1 + bias
        + 4 * n * d2 + 7 * n * d2      # BN1 matmul sums + elementwise + relu
        + 2 * n * d2 * d + n * d       # linear2 + bias
        + 4 * n * d + 7 * n * d        # BN2 matmul sums + elementwise (+relu)
    )
    bytes_accessed = 4 * (
        h0.size + s_src.size + s_dst.size + eemb.size + eps.size
        + w1.size + p1.size + w2.size + p2.size + n * d
    )

    return pl.pallas_call(
        fused_gine_kernel,
        grid_spec=grid_spec,
        out_shape=jax.ShapeDtypeStruct((n, d), jnp.float32),
        compiler_params=pltpu.CompilerParams(
            dimension_semantics=("arbitrary",),                 # layers are sequential
            vmem_limit_bytes=32 * 1024 * 1024,                  # portable incl. v7x
        ),
        cost_estimate=pl.CostEstimate(
            flops=num_layer * flops_per_layer,
            transcendentals=num_layer * (d + d2),
            bytes_accessed=bytes_accessed,
        ),
    )(h0, s_src, s_dst, eemb, eps, w1, p1, w2, p2)


# ----------------------------------------------------------------------------
# Parameter construction (deterministic, synthetic)
# ----------------------------------------------------------------------------
def init_params(key, num_layer, emb_dim):
    params = {}
    key, *aks = jax.random.split(key, 1 + NUM_ATOM_FEATS)
    params["atom_tables"] = [
        0.1 * jax.random.normal(aks[f], (ATOM_VOCAB[f], emb_dim), jnp.float32)
        for f in range(NUM_ATOM_FEATS)
    ]
    layers = []
    for _ in range(num_layer):
        key, kb0, kb1, kw1, kw2 = jax.random.split(key, 5)
        bond_keys = (kb0, kb1)
        layers.append({
            "bond_tables": [
                0.1 * jax.random.normal(bond_keys[f], (BOND_VOCAB[f], emb_dim),
                                        jnp.float32)
                for f in range(NUM_BOND_FEATS)
            ],
            "eps": jnp.zeros((1,), jnp.float32),
            "w1": (jax.random.normal(kw1, (emb_dim, 2 * emb_dim), jnp.float32)
                   / jnp.sqrt(emb_dim)),
            "b1": jnp.zeros((1, 2 * emb_dim), jnp.float32),
            "g1": jnp.ones((1, 2 * emb_dim), jnp.float32),
            "be1": jnp.zeros((1, 2 * emb_dim), jnp.float32),
            "w2": (jax.random.normal(kw2, (2 * emb_dim, emb_dim), jnp.float32)
                   / jnp.sqrt(2 * emb_dim)),
            "b2": jnp.zeros((1, emb_dim), jnp.float32),
            "g2": jnp.ones((1, emb_dim), jnp.float32),
            "be2": jnp.zeros((1, emb_dim), jnp.float32),
        })
    params["layers"] = layers
    return params


# ----------------------------------------------------------------------------
# Full GNN forward (JK='last', drop_ratio=0)
# ----------------------------------------------------------------------------
def gnn_forward(params, x_int, edge_index, edge_attr_int, num_layer):
    # AtomEncoder / BondEncoder embedding lookups stay as plain-JAX glue.
    h0 = sum(jnp.take(params["atom_tables"][f], x_int[:, f], axis=0)
             for f in range(NUM_ATOM_FEATS))
    eemb = jnp.stack([
        sum(jnp.take(params["layers"][l]["bond_tables"][f], edge_attr_int[:, f],
                     axis=0)
            for f in range(NUM_BOND_FEATS))
        for l in range(num_layer)], axis=0)                       # [L, E, D]

    layers = params["layers"]
    stack = lambda name: jnp.stack([layers[l][name] for l in range(num_layer)], 0)
    eps = stack("eps")                                            # [L, 1]
    w1, w2 = stack("w1"), stack("w2")
    # Pack the six tiny per-layer vectors into two arrays (fewer DMAs/layer).
    p1 = jnp.stack([jnp.concatenate([layers[l]["b1"], layers[l]["g1"],
                                     layers[l]["be1"]], axis=0)
                    for l in range(num_layer)], axis=0)           # [L, 3, 2D]
    p2 = jnp.stack([jnp.concatenate([layers[l]["b2"], layers[l]["g2"],
                                     layers[l]["be2"]], axis=0)
                    for l in range(num_layer)], axis=0)           # [L, 3, D]

    # Layer-invariant one-hot gather/scatter matrices for MXU message passing.
    n = h0.shape[0]
    src = edge_index[0].astype(jnp.int32)
    dst = edge_index[1].astype(jnp.int32)
    s_src = jax.nn.one_hot(src, n, dtype=jnp.float32)             # [E, N]
    s_dst = jax.nn.one_hot(dst, n, dtype=jnp.float32).T           # [N, E]

    return fused_gnn(h0, s_src, s_dst, eemb, eps, w1, p1, w2, p2)


# Pure-JAX reference (same math) for a correctness check.
def gnn_reference(params, x_int, edge_index, edge_attr_int, num_layer):
    h = sum(jnp.take(params["atom_tables"][f], x_int[:, f], axis=0)
            for f in range(NUM_ATOM_FEATS))
    src, dst = edge_index[0], edge_index[1]
    n = h.shape[0]
    for l in range(num_layer):
        lp = params["layers"][l]
        eemb = sum(jnp.take(lp["bond_tables"][f], edge_attr_int[:, f], axis=0)
                   for f in range(NUM_BOND_FEATS))
        msg = jnp.maximum(h[src] + eemb, 0.0)
        agg = jax.ops.segment_sum(msg, dst, num_segments=n)
        pre = (1.0 + lp["eps"][0]) * h + agg
        z = pre @ lp["w1"] + lp["b1"]
        m1 = jnp.mean(z, axis=0, keepdims=True)
        v1 = jnp.mean((z - m1) ** 2, axis=0, keepdims=True)
        z = (z - m1) * jax.lax.rsqrt(v1 + BN_EPS) * lp["g1"] + lp["be1"]
        z = jnp.maximum(z, 0.0)
        z = z @ lp["w2"] + lp["b2"]
        m2 = jnp.mean(z, axis=0, keepdims=True)
        v2 = jnp.mean((z - m2) ** 2, axis=0, keepdims=True)
        z = (z - m2) * jax.lax.rsqrt(v2 + BN_EPS) * lp["g2"] + lp["be2"]
        h = z if l == num_layer - 1 else jnp.maximum(z, 0.0)
    return h


# ----------------------------------------------------------------------------
if __name__ == "__main__":
    NUM_LAYER = 3
    EMB_DIM = 128          # lane-dense feature dim (multiple of 128)
    N_NODES = 64
    N_EDGES = 128

    key = jax.random.PRNGKey(0)
    k_param, k_x, k_src, k_dst, k_ea = jax.random.split(key, 5)

    params = init_params(k_param, NUM_LAYER, EMB_DIM)

    # integer categorical node / edge features
    x_int = jnp.stack(
        [jax.random.randint(jax.random.fold_in(k_x, f), (N_NODES,), 0, ATOM_VOCAB[f])
         for f in range(NUM_ATOM_FEATS)], axis=1)                    # [N, 2]
    edge_index = jnp.stack(
        [jax.random.randint(k_src, (N_EDGES,), 0, N_NODES),
         jax.random.randint(k_dst, (N_EDGES,), 0, N_NODES)], axis=0)  # [2, E]
    edge_attr_int = jnp.stack(
        [jax.random.randint(jax.random.fold_in(k_ea, f), (N_EDGES,), 0, BOND_VOCAB[f])
         for f in range(NUM_BOND_FEATS)], axis=1)                    # [E, 2]

    fwd = jax.jit(gnn_forward, static_argnums=(4,))
    out = fwd(params, x_int, edge_index, edge_attr_int, NUM_LAYER)
    out = jax.block_until_ready(out)

    assert out.shape == (N_NODES, EMB_DIM)
    assert bool(jnp.all(jnp.isfinite(out)))

    ref = gnn_reference(params, x_int, edge_index, edge_attr_int, NUM_LAYER)
    max_err = float(jnp.max(jnp.abs(out - ref)))
    assert jnp.allclose(out, ref, rtol=3e-2, atol=3e-2), max_err

    print("KERNEL_OK")
</pallas_src>

<mosaic_0001>
module attributes {stable_mosaic.version = 11 : i64} {
  func.func @fused_gine_kernel(%arg0: i32, %arg1: memref<64x128xf32, #tpu.memory_space<vmem>>, %arg2: memref<128x64xf32, #tpu.memory_space<vmem>>, %arg3: memref<64x128xf32, #tpu.memory_space<vmem>>, %arg4: memref<1x128x128xf32, #tpu.memory_space<vmem>>, %arg5: memref<3x1xf32, #tpu.memory_space<smem>>, %arg6: memref<1x128x256xf32, #tpu.memory_space<vmem>>, %arg7: memref<1x3x256xf32, #tpu.memory_space<vmem>>, %arg8: memref<1x256x128xf32, #tpu.memory_space<vmem>>, %arg9: memref<1x3x128xf32, #tpu.memory_space<vmem>>, %arg10: memref<64x128xf32, #tpu.memory_space<vmem>>) attributes {dimension_semantics = [#tpu.dimension_semantics<arbitrary>], iteration_bounds = array<i64: 3>, scalar_prefetch = 0 : i64, scratch_operands = 0 : i64, tpu.core_type = #tpu.core_type<tc>, window_params = [{pipeline_mode = #tpu.pipeline_mode<synchronous>, transform_indices = @transform_0, window_bounds = array<i64: 64, 128>}, {pipeline_mode = #tpu.pipeline_mode<synchronous>, transform_indices = @transform_1, window_bounds = array<i64: 128, 64>}, {pipeline_mode = #tpu.pipeline_mode<synchronous>, transform_indices = @transform_2, window_bounds = array<i64: 64, 128>}, {transform_indices = @transform_3, window_bounds = array<i64: 1, 128, 128>}, {transform_indices = @transform_4, window_bounds = array<i64: 3, 1>}, {transform_indices = @transform_5, window_bounds = array<i64: 1, 128, 256>}, {transform_indices = @transform_6, window_bounds = array<i64: 1, 3, 256>}, {transform_indices = @transform_7, window_bounds = array<i64: 1, 256, 128>}, {transform_indices = @transform_8, window_bounds = array<i64: 1, 3, 128>}, {pipeline_mode = #tpu.pipeline_mode<synchronous>, transform_indices = @transform_9, window_bounds = array<i64: 64, 128>}]} {
    %c2_i32 = arith.constant 2 : i32
    %0 = arith.cmpi eq, %arg0, %c2_i32 : i32
    %c0_i32 = arith.constant 0 : i32
    %1 = arith.cmpi eq, %arg0, %c0_i32 : i32
    %2 = arith.extui %1 : i1 to i32
    %c0_i32_0 = arith.constant 0 : i32
    %3 = arith.cmpi ne, %2, %c0_i32_0 : i32
    scf.if %3 {
      %c0_51 = arith.constant 0 : index
      %c0_52 = arith.constant 0 : index
      %86 = vector.load %arg1[%c0_51, %c0_52] : memref<64x128xf32, #tpu.memory_space<vmem>>, vector<64x128xf32>
      %c0_53 = arith.constant 0 : index
      %c0_54 = arith.constant 0 : index
      %87 = vector.load %arg10[%c0_53, %c0_54] : memref<64x128xf32, #tpu.memory_space<vmem>>, vector<64x128xf32>
      tpu.vector_store %arg10[%c0_53, %c0_54], %86 {strides = array<i32>} : memref<64x128xf32, #tpu.memory_space<vmem>>, vector<64x128xf32>,
    } else {
    }
    %c0 = arith.constant 0 : index
    %c0_1 = arith.constant 0 : index
    %4 = vector.load %arg10[%c0, %c0_1] : memref<64x128xf32, #tpu.memory_space<vmem>>, vector<64x128xf32>
    %cst = arith.constant 1.000000e+00 : f32
    %5 = vector.broadcast %cst : f32 to vector<1x64xf32>
    %c0_2 = arith.constant 0 : index
    %c0_3 = arith.constant 0 : index
    %6 = vector.load %arg2[%c0_2, %c0_3] : memref<128x64xf32, #tpu.memory_space<vmem>>, vector<128x64xf32>
    %cst_4 = arith.constant dense<0.000000e+00> : vector<128x128xf32>
    %7 = tpu.matmul %6, %4, %cst_4 {dimension_numbers = #tpu.dot_dimension_numbers<[1], [0], [0], [1], [0, 0, 1, 1], [], []>} : vector<128x64xf32>, vector<64x128xf32>, vector<128x128xf32> -> vector<128x128xf32>
    %c0_5 = arith.constant 0 : index
    %c0_6 = arith.constant 0 : index
    %c0_7 = arith.constant 0 : index
    %8 = vector.load %arg4[%c0_5, %c0_6, %c0_7] : memref<1x128x128xf32, #tpu.memory_space<vmem>>, vector<1x128x128xf32>
    %9 = vector.shape_cast %8 : vector<1x128x128xf32> to vector<128x128xf32>
    %10 = arith.addf %7, %9 : vector<128x128xf32>
    %cst_8 = arith.constant 0.000000e+00 : f32
    %11 = vector.broadcast %cst_8 : f32 to vector<128x128xf32>
    %12 = arith.maximumf %10, %11 : vector<128x128xf32>
    %c0_9 = arith.constant 0 : index
    %c0_10 = arith.constant 0 : index
    %13 = vector.load %arg3[%c0_9, %c0_10] : memref<64x128xf32, #tpu.memory_space<vmem>>, vector<64x128xf32>
    %cst_11 = arith.constant dense<0.000000e+00> : vector<64x128xf32>
    %14 = tpu.matmul %13, %12, %cst_11 {dimension_numbers = #tpu.dot_dimension_numbers<[1], [0], [0], [1], [0, 0, 1, 1], [], []>} : vector<64x128xf32>, vector<128x128xf32>, vector<64x128xf32> -> vector<64x128xf32>
    %15 = arith.index_cast %arg0 : i32 to index
    %c0_12 = arith.constant 0 : index
    %16 = memref.load %arg5[%15, %c0_12] : memref<3x1xf32, #tpu.memory_space<smem>>
    %cst_13 = arith.constant 1.000000e+00 : f32
    %17 = arith.addf %cst_13, %16 : f32
    %18 = vector.broadcast %17 : f32 to vector<64x128xf32>
    %19 = arith.mulf %18, %4 : vector<64x128xf32>
    %20 = arith.addf %19, %14 : vector<64x128xf32>
    %c0_14 = arith.constant 0 : index
    %c0_15 = arith.constant 0 : index
    %c0_16 = arith.constant 0 : index
    %21 = vector.load %arg6[%c0_14, %c0_15, %c0_16] : memref<1x128x256xf32, #tpu.memory_space<vmem>>, vector<1x128x256xf32>
    %22 = vector.shape_cast %21 : vector<1x128x256xf32> to vector<128x256xf32>
    %cst_17 = arith.constant dense<0.000000e+00> : vector<64x256xf32>
    %23 = tpu.matmul %20, %22, %cst_17 {dimension_numbers = #tpu.dot_dimension_numbers<[1], [0], [0], [1], [0, 0, 1, 1], [], []>} : vector<64x128xf32>, vector<128x256xf32>, vector<64x256xf32> -> vector<64x256xf32>
    %c0_18 = arith.constant 0 : index
    %c0_19 = arith.constant 0 : index
    %c0_20 = arith.constant 0 : index
    %24 = vector.load %arg7[%c0_18, %c0_19, %c0_20] : memref<1x3x256xf32, #tpu.memory_space<vmem>>, vector<1x1x256xf32>
    %25 = vector.shape_cast %24 : vector<1x1x256xf32> to vector<1x256xf32>
    %26 = vector.broadcast %25 : vector<1x256xf32> to vector<64x256xf32>
    %27 = arith.addf %23, %26 : vector<64x256xf32>
    %cst_21 = arith.constant dense<0.000000e+00> : vector<1x256xf32>
    %28 = tpu.matmul %5, %27, %cst_21 {dimension_numbers = #tpu.dot_dimension_numbers<[1], [0], [0], [1], [0, 0, 1, 1], [], []>} : vector<1x64xf32>, vector<64x256xf32>, vector<1x256xf32> -> vector<1x256xf32>
    %cst_22 = arith.constant 1.562500e-02 : f32
    %29 = vector.broadcast %cst_22 : f32 to vector<1x256xf32>
    %30 = arith.mulf %28, %29 : vector<1x256xf32>
    %31 = vector.broadcast %30 : vector<1x256xf32> to vector<64x256xf32>
    %32 = arith.subf %27, %31 : vector<64x256xf32>
    %33 = arith.mulf %32, %32 : vector<64x256xf32>
    %cst_23 = arith.constant dense<0.000000e+00> : vector<1x256xf32>
    %34 = tpu.matmul %5, %33, %cst_23 {dimension_numbers = #tpu.dot_dimension_numbers<[1], [0], [0], [1], [0, 0, 1, 1], [], []>} : vector<1x64xf32>, vector<64x256xf32>, vector<1x256xf32> -> vector<1x256xf32>
    %cst_24 = arith.constant 1.562500e-02 : f32
    %35 = vector.broadcast %cst_24 : f32 to vector<1x256xf32>
    %36 = arith.mulf %34, %35 : vector<1x256xf32>
    %cst_25 = arith.constant 9.99999974E-6 : f32
    %37 = vector.broadcast %cst_25 : f32 to vector<1x256xf32>
    %38 = arith.addf %36, %37 : vector<1x256xf32>
    %39 = math.rsqrt %38 : vector<1x256xf32>
    %40 = vector.broadcast %39 : vector<1x256xf32> to vector<64x256xf32>
    %41 = arith.mulf %32, %40 : vector<64x256xf32>
    %c0_26 = arith.constant 0 : index
    %c1 = arith.constant 1 : index
    %c0_27 = arith.constant 0 : index
    %42 = vector.load %arg7[%c0_26, %c1, %c0_27] : memref<1x3x256xf32, #tpu.memory_space<vmem>>, vector<1x1x256xf32>
    %43 = vector.shape_cast %42 : vector<1x1x256xf32> to vector<1x256xf32>
    %44 = vector.broadcast %43 : vector<1x256xf32> to vector<64x256xf32>
    %45 = arith.mulf %41, %44 : vector<64x256xf32>
    %c0_28 = arith.constant 0 : index
    %c2 = arith.constant 2 : index
    %c0_29 = arith.constant 0 : index
    %46 = vector.load %arg7[%c0_28, %c2, %c0_29] : memref<1x3x256xf32, #tpu.memory_space<vmem>>, vector<1x1x256xf32>
    %47 = vector.shape_cast %46 : vector<1x1x256xf32> to vector<1x256xf32>
    %48 = vector.broadcast %47 : vector<1x256xf32> to vector<64x256xf32>
    %49 = arith.addf %45, %48 : vector<64x256xf32>
    %cst_30 = arith.constant 0.000000e+00 : f32
    %50 = vector.broadcast %cst_30 : f32 to vector<64x256xf32>
    %51 = arith.maximumf %49, %50 : vector<64x256xf32>
    %c0_31 = arith.constant 0 : index
    %c0_32 = arith.constant 0 : index
    %c0_33 = arith.constant 0 : index
    %52 = vector.load %arg8[%c0_31, %c0_32, %c0_33] : memref<1x256x128xf32, #tpu.memory_space<vmem>>, vector<1x256x128xf32>
    %53 = vector.shape_cast %52 : vector<1x256x128xf32> to vector<256x128xf32>
    %cst_34 = arith.constant dense<0.000000e+00> : vector<64x128xf32>
    %54 = tpu.matmul %51, %53, %cst_34 {dimension_numbers = #tpu.dot_dimension_numbers<[1], [0], [0], [1], [0, 0, 1, 1], [], []>} : vector<64x256xf32>, vector<256x128xf32>, vector<64x128xf32> -> vector<64x128xf32>
    %c0_35 = arith.constant 0 : index
    %c0_36 = arith.constant 0 : index
    %c0_37 = arith.constant 0 : index
    %55 = vector.load %arg9[%c0_35, %c0_36, %c0_37] : memref<1x3x128xf32, #tpu.memory_space<vmem>>, vector<1x1x128xf32>
    %56 = vector.shape_cast %55 : vector<1x1x128xf32> to vector<1x128xf32>
    %57 = vector.broadcast %56 : vector<1x128xf32> to vector<64x128xf32>
    %58 = arith.addf %54, %57 : vector<64x128xf32>
    %cst_38 = arith.constant dense<0.000000e+00> : vector<1x128xf32>
    %59 = tpu.matmul %5, %58, %cst_38 {dimension_numbers = #tpu.dot_dimension_numbers<[1], [0], [0], [1], [0, 0, 1, 1], [], []>} : vector<1x64xf32>, vector<64x128xf32>, vector<1x128xf32> -> vector<1x128xf32>
    %cst_39 = arith.constant 1.562500e-02 : f32
    %60 = vector.broadcast %cst_39 : f32 to vector<1x128xf32>
    %61 = arith.mulf %59, %60 : vector<1x128xf32>
    %62 = vector.broadcast %61 : vector<1x128xf32> to vector<64x128xf32>
    %63 = arith.subf %58, %62 : vector<64x128xf32>
    %64 = arith.mulf %63, %63 : vector<64x128xf32>
    %cst_40 = arith.constant dense<0.000000e+00> : vector<1x128xf32>
    %65 = tpu.matmul %5, %64, %cst_40 {dimension_numbers = #tpu.dot_dimension_numbers<[1], [0], [0], [1], [0, 0, 1, 1], [], []>} : vector<1x64xf32>, vector<64x128xf32>, vector<1x128xf32> -> vector<1x128xf32>
    %cst_41 = arith.constant 1.562500e-02 : f32
    %66 = vector.broadcast %cst_41 : f32 to vector<1x128xf32>
    %67 = arith.mulf %65, %66 : vector<1x128xf32>
    %cst_42 = arith.constant 9.99999974E-6 : f32
    %68 = vector.broadcast %cst_42 : f32 to vector<1x128xf32>
    %69 = arith.addf %67, %68 : vector<1x128xf32>
    %70 = math.rsqrt %69 : vector<1x128xf32>
    %71 = vector.broadcast %70 : vector<1x128xf32> to vector<64x128xf32>
    %72 = arith.mulf %63, %71 : vector<64x128xf32>
    %c0_43 = arith.constant 0 : index
    %c1_44 = arith.constant 1 : index
    %c0_45 = arith.constant 0 : index
    %73 = vector.load %arg9[%c0_43, %c1_44, %c0_45] : memref<1x3x128xf32, #tpu.memory_space<vmem>>, vector<1x1x128xf32>
    %74 = vector.shape_cast %73 : vector<1x1x128xf32> to vector<1x128xf32>
    %75 = vector.broadcast %74 : vector<1x128xf32> to vector<64x128xf32>
    %76 = arith.mulf %72, %75 : vector<64x128xf32>
    %c0_46 = arith.constant 0 : index
    %c2_47 = arith.constant 2 : index
    %c0_48 = arith.constant 0 : index
    %77 = vector.load %arg9[%c0_46, %c2_47, %c0_48] : memref<1x3x128xf32, #tpu.memory_space<vmem>>, vector<1x1x128xf32>
    %78 = vector.shape_cast %77 : vector<1x1x128xf32> to vector<1x128xf32>
    %79 = vector.broadcast %78 : vector<1x128xf32> to vector<64x128xf32>
    %80 = arith.addf %76, %79 : vector<64x128xf32>
    %true = arith.constant true
    %81 = arith.xori %0, %true : i1
    %82 = arith.extui %81 : i1 to i32
    %c0_i32_49 = arith.constant 0 : i32
    %83 = arith.cmpi ne, %82, %c0_i32_49 : i32
    scf.if %83 {
      %cst_51 = arith.constant 0.000000e+00 : f32
      %86 = vector.broadcast %cst_51 : f32 to vector<64x128xf32>
      %87 = arith.maximumf %80, %86 : vector<64x128xf32>
      %c0_52 = arith.constant 0 : index
      %c0_53 = arith.constant 0 : index
      %88 = vector.load %arg10[%c0_52, %c0_53] : memref<64x128xf32, #tpu.memory_space<vmem>>, vector<64x128xf32>
      tpu.vector_store %arg10[%c0_52, %c0_53], %87 {strides = array<i32>} : memref<64x128xf32, #tpu.memory_space<vmem>>, vector<64x128xf32>,
    } else {
    }
    %84 = arith.extui %0 : i1 to i32
    %c0_i32_50 = arith.constant 0 : i32
    %85 = arith.cmpi ne, %84, %c0_i32_50 : i32
    scf.if %85 {
      %c0_51 = arith.constant 0 : index
      %c0_52 = arith.constant 0 : index
      %86 = vector.load %arg10[%c0_51, %c0_52] : memref<64x128xf32, #tpu.memory_space<vmem>>, vector<64x128xf32>
      tpu.vector_store %arg10[%c0_51, %c0_52], %80 {strides = array<i32>} : memref<64x128xf32, #tpu.memory_space<vmem>>, vector<64x128xf32>,
    } else {
    }
    return
  }
  func.func @transform_0(%arg0: i32) -> (i32, i32) {
    %c0_i32 = arith.constant 0 : i32
    %c0_i32_0 = arith.constant 0 : i32
    %c0_i32_1 = arith.constant 0 : i32
    return %c0_i32, %c0_i32_0 : i32, i32
  }
  func.func @transform_1(%arg0: i32) -> (i32, i32) {
    %c0_i32 = arith.constant 0 : i32
    %c0_i32_0 = arith.constant 0 : i32
    %c0_i32_1 = arith.constant 0 : i32
    return %c0_i32, %c0_i32_0 : i32, i32
  }
  func.func @transform_2(%arg0: i32) -> (i32, i32) {
    %c0_i32 = arith.constant 0 : i32
    %c0_i32_0 = arith.constant 0 : i32
    %c0_i32_1 = arith.constant 0 : i32
    return %c0_i32, %c0_i32_0 : i32, i32
  }
  func.func @transform_3(%arg0: i32) -> (i32, i32, i32) {
    %c0_i32 = arith.constant 0 : i32
    %c0_i32_0 = arith.constant 0 : i32
    %c0_i32_1 = arith.constant 0 : i32
    return %arg0, %c0_i32, %c0_i32_0 : i32, i32, i32
  }
  func.func @transform_4(%arg0: i32) -> (i32, i32) {
    %c0_i32 = arith.constant 0 : i32
    %c0_i32_0 = arith.constant 0 : i32
    %c0_i32_1 = arith.constant 0 : i32
    return %c0_i32, %c0_i32_0 : i32, i32
  }
  func.func @transform_5(%arg0: i32) -> (i32, i32, i32) {
    %c0_i32 = arith.constant 0 : i32
    %c0_i32_0 = arith.constant 0 : i32
    %c0_i32_1 = arith.constant 0 : i32
    return %arg0, %c0_i32, %c0_i32_0 : i32, i32, i32
  }
  func.func @transform_6(%arg0: i32) -> (i32, i32, i32) {
    %c0_i32 = arith.constant 0 : i32
    %c0_i32_0 = arith.constant 0 : i32
    %c0_i32_1 = arith.constant 0 : i32
    return %arg0, %c0_i32, %c0_i32_0 : i32, i32, i32
  }
  func.func @transform_7(%arg0: i32) -> (i32, i32, i32) {
    %c0_i32 = arith.constant 0 : i32
    %c0_i32_0 = arith.constant 0 : i32
    %c0_i32_1 = arith.constant 0 : i32
    return %arg0, %c0_i32, %c0_i32_0 : i32, i32, i32
  }
  func.func @transform_8(%arg0: i32) -> (i32, i32, i32) {
    %c0_i32 = arith.constant 0 : i32
    %c0_i32_0 = arith.constant 0 : i32
    %c0_i32_1 = arith.constant 0 : i32
    return %arg0, %c0_i32, %c0_i32_0 : i32, i32, i32
  }
  func.func @transform_9(%arg0: i32) -> (i32, i32) {
    %c0_i32 = arith.constant 0 : i32
    %c0_i32_0 = arith.constant 0 : i32
    %c0_i32_1 = arith.constant 0 : i32
    return %c0_i32, %c0_i32_0 : i32, i32
  }
}

</mosaic_0001>

<llo_original>
// kernel: gnn_forward.1
$region0: #{gnn_forward.1}
  #allocation0 [shape = 'u32[]', space=smem, size = 0x4, offset = 0x4, fixed_abs, tag = 'smem constant byte address 0x4 - core index']
  #allocation1 [shape = 'u32[72,128]{1,0:T(1,128)}', space=vmem, size = 0x9000, scoped, tag = 'internal scratch']
  %s0 = inlined_call_operand.vmem [shape: f32[64,128], index: 0, kind: input, shape index: {}]
  %s1 = inlined_call_operand.vmem [shape: f32[128,64], index: 1, kind: input, shape index: {}]
  %s2 = inlined_call_operand.vmem [shape: f32[64,128], index: 2, kind: input, shape index: {}]
  %s3 = inlined_call_operand.vmem [shape: f32[3,128,128], index: 3, kind: input, shape index: {}]
  %s4 = inlined_call_operand.vmem [shape: f32[3,1], index: 4, kind: input, shape index: {}]
  %s5 = inlined_call_operand.vmem [shape: f32[3,128,256], index: 5, kind: input, shape index: {}]
  %s6 = inlined_call_operand.vmem [shape: f32[3,3,256], index: 6, kind: input, shape index: {}]
  %s7 = inlined_call_operand.vmem [shape: f32[3,256,128], index: 7, kind: input, shape index: {}]
  %s8 = inlined_call_operand.vmem [shape: f32[3,3,128], index: 8, kind: input, shape index: {}]
  %s9 = inlined_call_operand.hbm [shape: f32[64,128], index: 9, kind: output, shape index: {}]
  %s10 = sld [smem:[#allocation0]]
  $region85: #{gnn_forward.1} parent=0
    _
  %s12 = ssub.s32 1, %s10
  %s13 = scalar_select 0, %s12, %s10
  $region1: #{gnn_forward.1} parent=0
    #allocation2 [shape = 'u8[2048]{0}', space=smem, size = 0x800, scoped, tag = 'input window, operand 4, single buffered']
    #allocation3 [shape = 's32[2]{0}', space=sflag, size = 0x8, scoped, tag = 'scoped memory for gnn_forward.1']
    #allocation4 [shape = 's32[2]{0}', space=sflag, size = 0x8, scoped, tag = 'scoped memory for gnn_forward.1']
    #allocation5 [shape = 'u8[32768]{0}', space=vmem, size = 0x8000, scoped, tag = 'output window, operand 0, single buffered']
    %14 = vsyncpa [#allocation4], 0
    %15 = vsyncpa [#allocation3], 0
    loop: start=0, step=1, limit=5
    $region2: #{gnn_forward.1} parent=1 // loop_pre_header
      _
    $region3: #{gnn_forward.1} parent=1 // loop_header
      %s17 = sphi 0, %s21
      %p18 = scmp.ge.s32.totalorder %s17, 5
      %s25 = sphi 0, %s25
      %s27 = sphi 0, %s25
      %s28 = sphi 0, %s27
      %s42 = sphi 0, %s28
      %s46 = sphi 0, %s46
      %s48 = sphi 0, %s46
      %s49 = sphi 0, %s48
      %s63 = sphi 0, %s49
      %s67 = sphi 0, %s67
      %s69 = sphi 0, %s67
      %s70 = sphi 0, %s69
      %s84 = sphi 0, %s70
      %s90 = sphi 0, %s92
      %s93 = sphi 0, %s90
      %s94 = sphi 0, %s93
      %s110 = sphi 0, %s94
      %s114 = sphi 0, %s114
      %s116 = sphi 0, %s114
      %s117 = sphi 0, %s116
      %s131 = sphi 0, %s117
      %s137 = sphi 0, %s139
      %s140 = sphi 0, %s137
      %s141 = sphi 0, %s140
      %s157 = sphi 0, %s141
      %s163 = sphi 0, %s165
      %s166 = sphi 0, %s163
      %s167 = sphi 0, %s166
      %s183 = sphi 0, %s167
      %s189 = sphi 0, %s191
      %s192 = sphi 0, %s189
      %s193 = sphi 0, %s192
      %s209 = sphi 0, %s193
      %s215 = sphi 0, %s217
      %s218 = sphi 0, %s215
      %s219 = sphi 0, %s218
      %s235 = sphi 0, %s219
      %s239 = sphi 0, %s239
      %s241 = sphi 0, %s239
      %s242 = sphi 0, %s241
      %s256 = sphi 0, %s242
    $region4: #{gnn_forward.1} parent=1 // loop_header_branch
      %20 = sbr.rel (%p18) target = $region8
    $region5: #{gnn_forward.1} parent=1 // loop_body
      %s22 = ssub.s32 %s17, 1
      %s23 = ssub.s32 %s17, 2
      %s24 = sadd.s32 %s17, 1
      %s26 = sadd.s32 %s25, 1
      %p29 = scmp.eq.s32.totalorder %s17, 2
      %p30 = scmp.ne.s32.totalorder %s25, %s27
      %p31 = scmp.eq.s32.totalorder %s17, 0
      %p32 = por %p30, %p31
      %p33 = scmp.ne.s32.totalorder %s25, %s27
      %p34 = scmp.eq.s32.totalorder %s22, 2
      %p35 = por %p33, %p34
      %p36 = scmp.ne.s32.totalorder %s27, %s28
      %p37 = scmp.eq.s32.totalorder %s22, 0
      %p38 = por %p36, %p37
      %p39 = scmp.ne.s32.totalorder %s27, %s28
      %p40 = scmp.eq.s32.totalorder %s23, 2
      %p41 = por %p39, %p40
      %p43 = scmp.ne.s32.totalorder %s28, %s42
      %p44 = scmp.eq.s32.totalorder %s23, 0
      %p45 = por %p43, %p44
      %s47 = sadd.s32 %s46, 1
      %p50 = scmp.eq.s32.totalorder %s17, 2
      %p51 = scmp.ne.s32.totalorder %s46, %s48
      %p52 = scmp.eq.s32.totalorder %s17, 0
      %p53 = por %p51, %p52
      %p54 = scmp.ne.s32.totalorder %s46, %s48
      %p55 = scmp.eq.s32.totalorder %s22, 2
      %p56 = por %p54, %p55
      %p57 = scmp.ne.s32.totalorder %s48, %s49
      %p58 = scmp.eq.s32.totalorder %s22, 0
      %p59 = por %p57, %p58
      %p60 = scmp.ne.s32.totalorder %s48, %s49
      %p61 = scmp.eq.s32.totalorder %s23, 2
      %p62 = por %p60, %p61
      %p64 = scmp.ne.s32.totalorder %s49, %s63
      %p65 = scmp.eq.s32.totalorder %s23, 0
      %p66 = por %p64, %p65
      %s68 = sadd.s32 %s67, 1
      %p71 = scmp.eq.s32.totalorder %s17, 2
      %p72 = scmp.ne.s32.totalorder %s67, %s69
      %p73 = scmp.eq.s32.totalorder %s17, 0
      %p74 = por %p72, %p73
      %p75 = scmp.ne.s32.totalorder %s67, %s69
      %p76 = scmp.eq.s32.totalorder %s22, 2
      %p77 = por %p75, %p76
      %p78 = scmp.ne.s32.totalorder %s69, %s70
      %p79 = scmp.eq.s32.totalorder %s22, 0
      %p80 = por %p78, %p79
      %p81 = scmp.ne.s32.totalorder %s69, %s70
      %p82 = scmp.eq.s32.totalorder %s23, 2
      %p83 = por %p81, %p82
      %p85 = scmp.ne.s32.totalorder %s70, %s84
      %p86 = scmp.eq.s32.totalorder %s23, 0
      %p87 = por %p85, %p86
      %s88 = ssub.s32 %s17, %s24
      %p89 = scmp.eq.s32.totalorder %s88, 0
      %s91 = sadd.s32 %s90, 1
      %s92 = scalar_select %p89, %s90, %s91
      %p95 = pneg %p89
      %p96 = scmp.eq.s32.totalorder %s17, 2
      %p97 = por %p95, %p96
      %p98 = scmp.ne.s32.totalorder %s90, %s93
      %p99 = scmp.eq.s32.totalorder %s17, 0
      %p100 = por %p98, %p99
      %p101 = scmp.ne.s32.totalorder %s90, %s93
      %p102 = scmp.eq.s32.totalorder %s22, 2
      %p103 = por %p101, %p102
      %p104 = scmp.ne.s32.totalorder %s93, %s94
      %p105 = scmp.eq.s32.totalorder %s22, 0
      %p106 = por %p104, %p105
      %p107 = scmp.ne.s32.totalorder %s93, %s94
      %p108 = scmp.eq.s32.totalorder %s23, 2
      %p109 = por %p107, %p108
      %p111 = scmp.ne.s32.totalorder %s94, %s110
      %p112 = scmp.eq.s32.totalorder %s23, 0
      %p113 = por %p111, %p112
      %s115 = sadd.s32 %s114, 1
      %p118 = scmp.eq.s32.totalorder %s17, 2
      %p119 = scmp.ne.s32.totalorder %s114, %s116
      %p120 = scmp.eq.s32.totalorder %s17, 0
      %p121 = por %p119, %p120
      %p122 = scmp.ne.s32.totalorder %s114, %s116
      %p123 = scmp.eq.s32.totalorder %s22, 2
      %p124 = por %p122, %p123
      %p125 = scmp.ne.s32.totalorder %s116, %s117
      %p126 = scmp.eq.s32.totalorder %s22, 0
      %p127 = por %p125, %p126
      %p128 = scmp.ne.s32.totalorder %s116, %s117
      %p129 = scmp.eq.s32.totalorder %s23, 2
      %p130 = por %p128, %p129
      %p132 = scmp.ne.s32.totalorder %s117, %s131
      %p133 = scmp.eq.s32.totalorder %s23, 0
      %p134 = por %p132, %p133
      %s135 = ssub.s32 %s17, %s24
      %p136 = scmp.eq.s32.totalorder %s135, 0
      %s138 = sadd.s32 %s137, 1
      %s139 = scalar_select %p136, %s137, %s138
      %p142 = pneg %p136
      %p143 = scmp.eq.s32.totalorder %s17, 2
      %p144 = por %p142, %p143
      %p145 = scmp.ne.s32.totalorder %s137, %s140
      %p146 = scmp.eq.s32.totalorder %s17, 0
      %p147 = por %p145, %p146
      %p148 = scmp.ne.s32.totalorder %s137, %s140
      %p149 = scmp.eq.s32.totalorder %s22, 2
      %p150 = por %p148, %p149
      %p151 = scmp.ne.s32.totalorder %s140, %s141
      %p152 = scmp.eq.s32.totalorder %s22, 0
      %p153 = por %p151, %p152
      %p154 = scmp.ne.s32.totalorder %s140, %s141
      %p155 = scmp.eq.s32.totalorder %s23, 2
      %p156 = por %p154, %p155
      %p158 = scmp.ne.s32.totalorder %s141, %s157
      %p159 = scmp.eq.s32.totalorder %s23, 0
      %p160 = por %p158, %p159
      %s161 = ssub.s32 %s17, %s24
      %p162 = scmp.eq.s32.totalorder %s161, 0
      %s164 = sadd.s32 %s163, 1
      %s165 = scalar_select %p162, %s163, %s164
      %p168 = pneg %p162
      %p169 = scmp.eq.s32.totalorder %s17, 2
      %p170 = por %p168, %p169
      %p171 = scmp.ne.s32.totalorder %s163, %s166
      %p172 = scmp.eq.s32.totalorder %s17, 0
      %p173 = por %p171, %p172
      %p174 = scmp.ne.s32.totalorder %s163, %s166
      %p175 = scmp.eq.s32.totalorder %s22, 2
      %p176 = por %p174, %p175
      %p177 = scmp.ne.s32.totalorder %s166, %s167
      %p178 = scmp.eq.s32.totalorder %s22, 0
      %p179 = por %p177, %p178
      %p180 = scmp.ne.s32.totalorder %s166, %s167
      %p181 = scmp.eq.s32.totalorder %s23, 2
      %p182 = por %p180, %p181
      %p184 = scmp.ne.s32.totalorder %s167, %s183
      %p185 = scmp.eq.s32.totalorder %s23, 0
      %p186 = por %p184, %p185
      %s187 = ssub.s32 %s17, %s24
      %p188 = scmp.eq.s32.totalorder %s187, 0
      %s190 = sadd.s32 %s189, 1
      %s191 = scalar_select %p188, %s189, %s190
      %p194 = pneg %p188
      %p195 = scmp.eq.s32.totalorder %s17, 2
      %p196 = por %p194, %p195
      %p197 = scmp.ne.s32.totalorder %s189, %s192
      %p198 = scmp.eq.s32.totalorder %s17, 0
      %p199 = por %p197, %p198
      %p200 = scmp.ne.s32.totalorder %s189, %s192
      %p201 = scmp.eq.s32.totalorder %s22, 2
      %p202 = por %p200, %p201
      %p203 = scmp.ne.s32.totalorder %s192, %s193
      %p204 = scmp.eq.s32.totalorder %s22, 0
      %p205 = por %p203, %p204
      %p206 = scmp.ne.s32.totalorder %s192, %s193
      %p207 = scmp.eq.s32.totalorder %s23, 2
      %p208 = por %p206, %p207
      %p210 = scmp.ne.s32.totalorder %s193, %s209
      %p211 = scmp.eq.s32.totalorder %s23, 0
      %p212 = por %p210, %p211
      %s213 = ssub.s32 %s17, %s24
      %p214 = scmp.eq.s32.totalorder %s213, 0
      %s216 = sadd.s32 %s215, 1
      %s217 = scalar_select %p214, %s215, %s216
      %p220 = pneg %p214
      %p221 = scmp.eq.s32.totalorder %s17, 2
      %p222 = por %p220, %p221
      %p223 = scmp.ne.s32.totalorder %s215, %s218
      %p224 = scmp.eq.s32.totalorder %s17, 0
      %p225 = por %p223, %p224
      %p226 = scmp.ne.s32.totalorder %s215, %s218
      %p227 = scmp.eq.s32.totalorder %s22, 2
      %p228 = por %p226, %p227
      %p229 = scmp.ne.s32.totalorder %s218, %s219
      %p230 = scmp.eq.s32.totalorder %s22, 0
      %p231 = por %p229, %p230
      %p232 = scmp.ne.s32.totalorder %s218, %s219
      %p233 = scmp.eq.s32.totalorder %s23, 2
      %p234 = por %p232, %p233
      %p236 = scmp.ne.s32.totalorder %s219, %s235
      %p237 = scmp.eq.s32.totalorder %s23, 0
      %p238 = por %p236, %p237
      %s240 = sadd.s32 %s239, 1
      %p243 = scmp.eq.s32.totalorder %s17, 2
      %p244 = scmp.ne.s32.totalorder %s239, %s241
      %p245 = scmp.eq.s32.totalorder %s17, 0
      %p246 = por %p244, %p245
      %p247 = scmp.ne.s32.totalorder %s239, %s241
      %p248 = scmp.eq.s32.totalorder %s22, 2
      %p249 = por %p247, %p248
      %p250 = scmp.ne.s32.totalorder %s241, %s242
      %p251 = scmp.eq.s32.totalorder %s22, 0
      %p252 = por %p250, %p251
      %p253 = scmp.ne.s32.totalorder %s241, %s242
      %p254 = scmp.eq.s32.totalorder %s23, 2
      %p255 = por %p253, %p254
      %p257 = scmp.ne.s32.totalorder %s242, %s256
      %p258 = scmp.eq.s32.totalorder %s23, 0
      %p259 = por %p257, %p258
      %p260 = scmp.le.s32.totalorder 1, %s17
      %p261 = scmp.lt.s32.totalorder %s17, 4
      %p262 = pnand %p260, %p261
      %p263 = pneg %p262
      // Predicated region
      $region9: #{gnn_forward.1} parent=5 // pred_check
        _
      $region10: #{gnn_forward.1} parent=5 // pred_check_branch
        %265 = sbr.rel (%p262) target = $region12
      $region11: #{gnn_forward.1} parent=5 // pred_region
        %s266 = ssub.s32 %s17, 1
        // Predicated region
        $region13: #{gnn_forward.1} parent=11 // pred_check
          %p267 = pneg %p38
        $region14: #{gnn_forward.1} parent=11 // pred_check_branch
          %269 = sbr.rel (%p267) target = $region16
        $region15: #{gnn_forward.1} parent=11 // pred_region
          _
        $region16: #{gnn_forward.1} parent=11 // pred_fallthru
          _
        // Predicated region
        $region17: #{gnn_forward.1} parent=11 // pred_check
          %p270 = pneg %p59
        $region18: #{gnn_forward.1} parent=11 // pred_check_branch
          %272 = sbr.rel (%p270) target = $region20
        $region19: #{gnn_forward.1} parent=11 // pred_region
          _
        $region20: #{gnn_forward.1} parent=11 // pred_fallthru
          _
        // Predicated region
        $region21: #{gnn_forward.1} parent=11 // pred_check
          %p273 = pneg %p80
        $region22: #{gnn_forward.1} parent=11 // pred_check_branch
          %275 = sbr.rel (%p273) target = $region24
        $region23: #{gnn_forward.1} parent=11 // pred_region
          _
        $region24: #{gnn_forward.1} parent=11 // pred_fallthru
          _
        // Predicated region
        $region25: #{gnn_forward.1} parent=11 // pred_check
          %p276 = pneg %p127
        $region26: #{gnn_forward.1} parent=11 // pred_check_branch
          %278 = sbr.rel (%p276) target = $region28
        $region27: #{gnn_forward.1} parent=11 // pred_region
          %280 = vsyncadd [#allocation4], 0
          %s282 = sshll.u32 %s4, 4
          %s283 = int_to_ptr.vmem [resolvable:$true] %s282
          %285 = dma.vmem_to_smem %s283, 64, [#allocation2], [#allocation4]
        $region28: #{gnn_forward.1} parent=11 // pred_fallthru
          _
      $region12: #{gnn_forward.1} parent=5 // pred_fallthru
        _
      %p286 = scmp.lt.s32.totalorder %s17, 3
      // Predicated region
      $region29: #{gnn_forward.1} parent=5 // pred_check
        %p287 = pneg %p286
      $region30: #{gnn_forward.1} parent=5 // pred_check_branch
        %289 = sbr.rel (%p287) target = $region32
      $region31: #{gnn_forward.1} parent=5 // pred_region
        // Predicated region
        $region33: #{gnn_forward.1} parent=31 // pred_check
          %p290 = pneg %p100
        $region34: #{gnn_forward.1} parent=31 // pred_check_branch
          %292 = sbr.rel (%p290) target = $region36
        $region35: #{gnn_forward.1} parent=31 // pred_region
          %p293 = scmp.lt.s32.totalorder %s17, 2
          %s294 = scalar_select %p293, %s17, 2
          %s295 = smul.addr %s294, 16
          %s296 = smul.addr %s295, 8
          %s297 = scalar_lea.vmem %s3, %s296
        $region36: #{gnn_forward.1} parent=31 // pred_fallthru
          _
        // Predicated region
        $region37: #{gnn_forward.1} parent=31 // pred_check
          %p298 = pneg %p147
        $region38: #{gnn_forward.1} parent=31 // pred_check_branch
          %300 = sbr.rel (%p298) target = $region40
        $region39: #{gnn_forward.1} parent=31 // pred_region
          %p301 = scmp.lt.s32.totalorder %s17, 2
          %s302 = scalar_select %p301, %s17, 2
          %s303 = smul.addr %s302, 32
          %s304 = smul.addr %s303, 8
          %s305 = scalar_lea.vmem %s5, %s304
        $region40: #{gnn_forward.1} parent=31 // pred_fallthru
          _
        // Predicated region
        $region41: #{gnn_forward.1} parent=31 // pred_check
          %p306 = pneg %p173
        $region42: #{gnn_forward.1} parent=31 // pred_check_branch
          %308 = sbr.rel (%p306) target = $region44
        $region43: #{gnn_forward.1} parent=31 // pred_region
          %p309 = scmp.lt.s32.totalorder %s17, 2
          %s310 = scalar_select %p309, %s17, 2
          %s311 = smul.addr %s310, 2
          %s312 = smul.addr %s311, 4
          %s313 = scalar_lea.vmem %s6, %s312
        $region44: #{gnn_forward.1} parent=31 // pred_fallthru
          _
        // Predicated region
        $region45: #{gnn_forward.1} parent=31 // pred_check
          %p314 = pneg %p199
        $region46: #{gnn_forward.1} parent=31 // pred_check_branch
          %316 = sbr.rel (%p314) target = $region48
        $region47: #{gnn_forward.1} parent=31 // pred_region
          %p317 = scmp.lt.s32.totalorder %s17, 2
          %s318 = scalar_select %p317, %s17, 2
          %s319 = smul.addr %s318, 32
          %s320 = smul.addr %s319, 8
          %s321 = scalar_lea.vmem %s7, %s320
        $region48: #{gnn_forward.1} parent=31 // pred_fallthru
          _
        // Predicated region
        $region49: #{gnn_forward.1} parent=31 // pred_check
          %p322 = pneg %p225
        $region50: #{gnn_forward.1} parent=31 // pred_check_branch
          %324 = sbr.rel (%p322) target = $region52
        $region51: #{gnn_forward.1} parent=31 // pred_region
          %p325 = scmp.lt.s32.totalorder %s17, 2
          %s326 = scalar_select %p325, %s17, 2
          %s327 = smul.addr %s326, 4
          %s328 = scalar_lea.vmem %s8, %s327
        $region52: #{gnn_forward.1} parent=31 // pred_fallthru
          _
      $region32: #{gnn_forward.1} parent=5 // pred_fallthru
        _
      %p329 = scmp.le.s32.totalorder 1, %s17
      %p330 = scmp.lt.s32.totalorder %s17, 4
      %p331 = pnand %p329, %p330
      %p332 = pneg %p331
      // Predicated region
      $region53: #{gnn_forward.1} parent=5 // pred_check
        _
      $region54: #{gnn_forward.1} parent=5 // pred_check_branch
        %334 = sbr.rel (%p331) target = $region56
      $region55: #{gnn_forward.1} parent=5 // pred_region
        %s335 = ssub.s32 %s17, 1
        // Predicated region
        $region57: #{gnn_forward.1} parent=55 // pred_check
          %p336 = pneg %p127
        $region58: #{gnn_forward.1} parent=55 // pred_check_branch
          %338 = sbr.rel (%p336) target = $region60
        $region59: #{gnn_forward.1} parent=55 // pred_region
          %340 = dma.done [#allocation4], 64
        $region60: #{gnn_forward.1} parent=55 // pred_fallthru
          _
        %341 = sfence
        %p342 = pneg %p38
        %p343 = pneg %p35
        %p344 = pneg %p59
        %p345 = pneg %p56
        %p346 = pneg %p80
        %p347 = pneg %p77
        %p348 = scmp.lt.s32.totalorder %s22, 2
        %s349 = scalar_select %p348, %s22, 2
        %s350 = smul.addr %s349, 16
        %s351 = smul.addr %s350, 8
        %s352 = scalar_lea.vmem %s3, %s351
        %p353 = pneg %p106
        %p354 = pneg %p103
        %p355 = pneg %p127
        %p356 = pneg %p124
        %p357 = scmp.lt.s32.totalorder %s22, 2
        %s358 = scalar_select %p357, %s22, 2
        %s359 = smul.addr %s358, 32
        %s360 = smul.addr %s359, 8
        %s361 = scalar_lea.vmem %s5, %s360
        %p362 = pneg %p153
        %p363 = pneg %p150
        %p364 = scmp.lt.s32.totalorder %s22, 2
        %s365 = scalar_select %p364, %s22, 2
        %s366 = smul.addr %s365, 2
        %s367 = smul.addr %s366, 4
        %s368 = scalar_lea.vmem %s6, %s367
        %p369 = pneg %p179
        %p370 = pneg %p176
        %p371 = scmp.lt.s32.totalorder %s22, 2
        %s372 = scalar_select %p371, %s22, 2
        %s373 = smul.addr %s372, 32
        %s374 = smul.addr %s373, 8
        %s375 = scalar_lea.vmem %s7, %s374
        %p376 = pneg %p205
        %p377 = pneg %p202
        %p378 = scmp.lt.s32.totalorder %s22, 2
        %s379 = scalar_select %p378, %s22, 2
        %s380 = smul.addr %s379, 4
        %s381 = scalar_lea.vmem %s8, %s380
        %p382 = pneg %p231
        %p383 = pneg %p228
        %p384 = pneg %p252
        %p385 = pneg %p249
        %p386 = scmp.lt.s32.totalorder %s22, 2
        %s387 = scalar_select %p386, %s22, 2
        %s388 = smul.addr %s387, 16
        %s389 = smul.addr %s388, 8
        %s390 = scalar_lea.vmem %s3, %s389
        %p391 = scmp.lt.s32.totalorder %s22, 2
        %s392 = scalar_select %p391, %s22, 2
        %s393 = smul.addr %s392, 32
        %s394 = smul.addr %s393, 8
        %s395 = scalar_lea.vmem %s5, %s394
        %p396 = scmp.lt.s32.totalorder %s22, 2
        %s397 = scalar_select %p396, %s22, 2
        %s398 = smul.addr %s397, 2
        %s399 = smul.addr %s398, 4
        %s400 = scalar_lea.vmem %s6, %s399
        %p401 = scmp.lt.s32.totalorder %s22, 2
        %s402 = scalar_select %p401, %s22, 2
        %s403 = smul.addr %s402, 32
        %s404 = smul.addr %s403, 8
        %s405 = scalar_lea.vmem %s7, %s404
        %p406 = scmp.lt.s32.totalorder %s22, 2
        %s407 = scalar_select %p406, %s22, 2
        %s408 = smul.addr %s407, 4
        %s409 = scalar_lea.vmem %s8, %s408
        %p410 = scmp.eq.s32.totalorder %s22, 2
        %p411 = scmp.eq.s32.totalorder %s22, 0
        // Predicated region
        $region61: #{gnn_forward.1} parent=55 // pred_check
          %p412 = pneg %p411
        $region62: #{gnn_forward.1} parent=55 // pred_check_branch
          %414 = sbr.rel (%p412) target = $region64
        $region63: #{gnn_forward.1} parent=55 // pred_region
          %v415 = vld [vmem:[%s0] sm:$0xff]
          %v416 = vld [vmem:[%s0 + $0x8] sm:$0xff]
          %v417 = vld [vmem:[%s0 + $0x10] sm:$0xff]
          %v418 = vld [vmem:[%s0 + $0x18] sm:$0xff]
          %v419 = vld [vmem:[%s0 + $0x20] sm:$0xff]
          %v420 = vld [vmem:[%s0 + $0x28] sm:$0xff]
          %v421 = vld [vmem:[%s0 + $0x30] sm:$0xff]
          %v422 = vld [vmem:[%s0 + $0x38] sm:$0xff]
          %423 = vst [vmem:[#allocation5] sm:$0xff] %v415
          %424 = vst [vmem:[#allocation5 + $0x8] sm:$0xff] %v416
          %425 = vst [vmem:[#allocation5 + $0x10] sm:$0xff] %v417
          %426 = vst [vmem:[#allocation5 + $0x18] sm:$0xff] %v418
          %427 = vst [vmem:[#allocation5 + $0x20] sm:$0xff] %v419
          %428 = vst [vmem:[#allocation5 + $0x28] sm:$0xff] %v420
          %429 = vst [vmem:[#allocation5 + $0x30] sm:$0xff] %v421
          %430 = vst [vmem:[#allocation5 + $0x38] sm:$0xff] %v422
        $region64: #{gnn_forward.1} parent=55 // pred_fallthru
          _
        %v431 = vld [vmem:[#allocation5] sm:$0xff]
        %v432 = vld [vmem:[#allocation5 + $0x8] sm:$0xff]
        %v433 = vld [vmem:[#allocation5 + $0x10] sm:$0xff]
        %v434 = vld [vmem:[#allocation5 + $0x18] sm:$0xff]
        %v435 = vld [vmem:[#allocation5 + $0x20] sm:$0xff]
        %v436 = vld [vmem:[#allocation5 + $0x28] sm:$0xff]
        %v437 = vld [vmem:[#allocation5 + $0x30] sm:$0xff]
        %v438 = vld [vmem:[#allocation5 + $0x38] sm:$0xff]
        %v439 = vld [vmem:[%s1] sm:$0xff]
        %v440 = vld [vmem:[%s1 + $0x8] sm:$0xff]
        %v441 = vld [vmem:[%s1 + $0x10] sm:$0xff]
        %v442 = vld [vmem:[%s1 + $0x18] sm:$0xff]
        %v443 = vld [vmem:[%s1 + $0x20] sm:$0xff]
        %v444 = vld [vmem:[%s1 + $0x28] sm:$0xff]
        %v445 = vld [vmem:[%s1 + $0x30] sm:$0xff]
        %v446 = vld [vmem:[%s1 + $0x38] sm:$0xff]
        %v447 = vld [vmem:[%s1 + $0x40] sm:$0xff]
        %v448 = vld [vmem:[%s1 + $0x48] sm:$0xff]
        %v449 = vld [vmem:[%s1 + $0x50] sm:$0xff]
        %v450 = vld [vmem:[%s1 + $0x58] sm:$0xff]
        %v451 = vld [vmem:[%s1 + $0x60] sm:$0xff]
        %v452 = vld [vmem:[%s1 + $0x68] sm:$0xff]
        %v453 = vld [vmem:[%s1 + $0x70] sm:$0xff]
        %v454 = vld [vmem:[%s1 + $0x78] sm:$0xff]
        %v455 = vld [vmem:[%s390] sm:$0xff]
        %v456 = vld [vmem:[%s390 + $0x8] sm:$0xff]
        %v457 = vld [vmem:[%s390 + $0x10] sm:$0xff]
        %v458 = vld [vmem:[%s390 + $0x18] sm:$0xff]
        %v459 = vld [vmem:[%s390 + $0x20] sm:$0xff]
        %v460 = vld [vmem:[%s390 + $0x28] sm:$0xff]
        %v461 = vld [vmem:[%s390 + $0x30] sm:$0xff]
        %v462 = vld [vmem:[%s390 + $0x38] sm:$0xff]
        %v463 = vld [vmem:[%s390 + $0x40] sm:$0xff]
        %v464 = vld [vmem:[%s390 + $0x48] sm:$0xff]
        %v465 = vld [vmem:[%s390 + $0x50] sm:$0xff]
        %v466 = vld [vmem:[%s390 + $0x58] sm:$0xff]
        %v467 = vld [vmem:[%s390 + $0x60] sm:$0xff]
        %v468 = vld [vmem:[%s390 + $0x68] sm:$0xff]
        %v469 = vld [vmem:[%s390 + $0x70] sm:$0xff]
        %v470 = vld [vmem:[%s390 + $0x78] sm:$0xff]
        %vm471 = vcmask 523264
        %v473 = vsel %vm471, %v439, 0
        %v476 = vsel %vm471, %v440, 0
        %v479 = vsel %vm471, %v441, 0
        %v482 = vsel %vm471, %v442, 0
        %v485 = vsel %vm471, %v443, 0
        %v488 = vsel %vm471, %v444, 0
        %v491 = vsel %vm471, %v445, 0
        %v494 = vsel %vm471, %v446, 0
        %v497 = vsel %vm471, %v447, 0
        %v500 = vsel %vm471, %v448, 0
        %v503 = vsel %vm471, %v449, 0
        %v506 = vsel %vm471, %v450, 0
        %v509 = vsel %vm471, %v451, 0
        %v512 = vsel %vm471, %v452, 0
        %v515 = vsel %vm471, %v453, 0
        %v518 = vsel %vm471, %v454, 0
        %520 = vmatpush.msra.mxu0 0.0
        %521 = vmatpush.msra.mxu0 0.0
        %522 = vmatpush.msra.mxu0 0.0
        %523 = vmatpush.msra.mxu0 0.0
        %524 = vmatpush.msra.mxu0 0.0
        %525 = vmatpush.msra.mxu0 0.0
        %526 = vmatpush.msra.mxu0 0.0
        %527 = vmatpush.msra.mxu0 0.0
        %528 = vmatpush.msra.mxu0 %v438
        %529 = vmatpush.msra.mxu0 %v437
        %530 = vmatpush.msra.mxu0 %v436
        %531 = vmatpush.msra.mxu0 %v435
        %532 = vmatpush.msra.mxu0 %v434
        %533 = vmatpush.msra.mxu0 %v433
        %534 = vmatpush.msra.mxu0 %v432
        %535 = vmatpush.msra.mxu0 %v431
        %536 = vmatmul.f32.gmra.mxu0 %v473
        %v537 = vpop.f32.mrf.mxu0
        %v538 = vadd.f32 %v455, %v537
        %539 = vmatmul.f32.gmra.mxu0 %v476
        %v540 = vpop.f32.mrf.mxu0
        %v541 = vadd.f32 %v456, %v540
        %542 = vmatmul.f32.gmra.mxu0 %v479
        %v543 = vpop.f32.mrf.mxu0
        %v544 = vadd.f32 %v457, %v543
        %545 = vmatmul.f32.gmra.mxu0 %v482
        %v546 = vpop.f32.mrf.mxu0
        %v547 = vadd.f32 %v458, %v546
        %548 = vmatmul.f32.gmra.mxu0 %v485
        %v549 = vpop.f32.mrf.mxu0
        %v550 = vadd.f32 %v459, %v549
        %551 = vmatmul.f32.gmra.mxu0 %v488
        %v552 = vpop.f32.mrf.mxu0
        %v553 = vadd.f32 %v460, %v552
        %554 = vmatmul.f32.gmra.mxu0 %v491
        %v555 = vpop.f32.mrf.mxu0
        %v556 = vadd.f32 %v461, %v555
        %557 = vmatmul.f32.gmra.mxu0 %v494
        %v558 = vpop.f32.mrf.mxu0
        %v559 = vadd.f32 %v462, %v558
        %560 = vmatmul.f32.gmra.mxu0 %v497
        %v561 = vpop.f32.mrf.mxu0
        %v562 = vadd.f32 %v463, %v561
        %563 = vmatmul.f32.gmra.mxu0 %v500
        %v564 = vpop.f32.mrf.mxu0
        %v565 = vadd.f32 %v464, %v564
        %566 = vmatmul.f32.gmra.mxu0 %v503
        %v567 = vpop.f32.mrf.mxu0
        %v568 = vadd.f32 %v465, %v567
        %569 = vmatmul.f32.gmra.mxu0 %v506
        %v570 = vpop.f32.mrf.mxu0
        %v571 = vadd.f32 %v466, %v570
        %572 = vmatmul.f32.gmra.mxu0 %v509
        %v573 = vpop.f32.mrf.mxu0
        %v574 = vadd.f32 %v467, %v573
        %575 = vmatmul.f32.gmra.mxu0 %v512
        %v576 = vpop.f32.mrf.mxu0
        %v577 = vadd.f32 %v468, %v576
        %578 = vmatmul.f32.gmra.mxu0 %v515
        %v579 = vpop.f32.mrf.mxu0
        %v580 = vadd.f32 %v469, %v579
        %581 = vmatmul.f32.gmra.mxu0 %v518
        %v582 = vpop.f32.mrf.mxu0
        %v583 = vadd.f32 %v470, %v582
        %584 = vdwg.mxu0
        %v585 = vmax.f32 %v538, 0.0
        %v586 = vmax.f32 %v541, 0.0
        %v587 = vmax.f32 %v544, 0.0
        %v588 = vmax.f32 %v547, 0.0
        %v589 = vmax.f32 %v550, 0.0
        %v590 = vmax.f32 %v553, 0.0
        %v591 = vmax.f32 %v556, 0.0
        %v592 = vmax.f32 %v559, 0.0
        %v593 = vmax.f32 %v562, 0.0
        %v594 = vmax.f32 %v565, 0.0
        %v595 = vmax.f32 %v568, 0.0
        %v596 = vmax.f32 %v571, 0.0
        %v597 = vmax.f32 %v574, 0.0
        %v598 = vmax.f32 %v577, 0.0
        %v599 = vmax.f32 %v580, 0.0
        %v600 = vmax.f32 %v583, 0.0
        %v601 = vld [vmem:[%s2] sm:$0xff]
        %v602 = vld [vmem:[%s2 + $0x8] sm:$0xff]
        %v603 = vld [vmem:[%s2 + $0x10] sm:$0xff]
        %v604 = vld [vmem:[%s2 + $0x18] sm:$0xff]
        %v605 = vld [vmem:[%s2 + $0x20] sm:$0xff]
        %v606 = vld [vmem:[%s2 + $0x28] sm:$0xff]
        %v607 = vld [vmem:[%s2 + $0x30] sm:$0xff]
        %v608 = vld [vmem:[%s2 + $0x38] sm:$0xff]
        %609 = vmatpush.msra.mxu0 %v600
        %610 = vmatpush.msra.mxu0 %v599
        %611 = vmatpush.msra.mxu0 %v598
        %612 = vmatpush.msra.mxu0 %v597
        %613 = vmatpush.msra.mxu0 %v596
        %614 = vmatpush.msra.mxu0 %v595
        %615 = vmatpush.msra.mxu0 %v594
        %616 = vmatpush.msra.mxu0 %v593
        %617 = vmatpush.msra.mxu0 %v592
        %618 = vmatpush.msra.mxu0 %v591
        %619 = vmatpush.msra.mxu0 %v590
        %620 = vmatpush.msra.mxu0 %v589
        %621 = vmatpush.msra.mxu0 %v588
        %622 = vmatpush.msra.mxu0 %v587
        %623 = vmatpush.msra.mxu0 %v586
        %624 = vmatpush.msra.mxu0 %v585
        %625 = vmatmul.f32.gmra.mxu0 %v601
        %v626 = vpop.f32.mrf.mxu0
        %v627 = vadd.f32 0.0, %v626
        %628 = vmatmul.f32.gmra.mxu0 %v602
        %v629 = vpop.f32.mrf.mxu0
        %v630 = vadd.f32 0.0, %v629
        %631 = vmatmul.f32.gmra.mxu0 %v603
        %v632 = vpop.f32.mrf.mxu0
        %v633 = vadd.f32 0.0, %v632
        %634 = vmatmul.f32.gmra.mxu0 %v604
        %v635 = vpop.f32.mrf.mxu0
        %v636 = vadd.f32 0.0, %v635
        %637 = vmatmul.f32.gmra.mxu0 %v605
        %v638 = vpop.f32.mrf.mxu0
        %v639 = vadd.f32 0.0, %v638
        %640 = vmatmul.f32.gmra.mxu0 %v606
        %v641 = vpop.f32.mrf.mxu0
        %v642 = vadd.f32 0.0, %v641
        %643 = vmatmul.f32.gmra.mxu0 %v607
        %v644 = vpop.f32.mrf.mxu0
        %v645 = vadd.f32 0.0, %v644
        %646 = vmatmul.f32.gmra.mxu0 %v608
        %v647 = vpop.f32.mrf.mxu0
        %v648 = vadd.f32 0.0, %v647
        %649 = vdwg.mxu0
        %s650 = smul.u32 %s22, 128
        %s651 = sld [smem:[#allocation2 + %s650]]
        %s652 = sadd.f32 %s651, 1.0
        %v653 = vstv %s652
        %v654 = vmul.f32 %v653, %v431
        %v655 = vmul.f32 %v653, %v432
        %v656 = vmul.f32 %v653, %v433
        %v657 = vmul.f32 %v653, %v434
        %v658 = vmul.f32 %v653, %v435
        %v659 = vmul.f32 %v653, %v436
        %v660 = vmul.f32 %v653, %v437
        %v661 = vmul.f32 %v653, %v438
        %v662 = vadd.f32 %v654, %v627
        %v663 = vadd.f32 %v655, %v630
        %v664 = vadd.f32 %v656, %v633
        %v665 = vadd.f32 %v657, %v636
        %v666 = vadd.f32 %v658, %v639
        %v667 = vadd.f32 %v659, %v642
        %v668 = vadd.f32 %v660, %v645
        %v669 = vadd.f32 %v661, %v648
        %v670 = vld [vmem:[%s395] sm:$0xff]
        %v671 = vld [vmem:[%s395 + $0x8] sm:$0xff]
        %v672 = vld [vmem:[%s395 + $0x10] sm:$0xff]
        %v673 = vld [vmem:[%s395 + $0x18] sm:$0xff]
        %v674 = vld [vmem:[%s395 + $0x20] sm:$0xff]
        %v675 = vld [vmem:[%s395 + $0x28] sm:$0xff]
        %v676 = vld [vmem:[%s395 + $0x30] sm:$0xff]
        %v677 = vld [vmem:[%s395 + $0x38] sm:$0xff]
        %v678 = vld [vmem:[%s395 + $0x40] sm:$0xff]
        %v679 = vld [vmem:[%s395 + $0x48] sm:$0xff]
        %v680 = vld [vmem:[%s395 + $0x50] sm:$0xff]
        %v681 = vld [vmem:[%s395 + $0x58] sm:$0xff]
        %v682 = vld [vmem:[%s395 + $0x60] sm:$0xff]
        %v683 = vld [vmem:[%s395 + $0x68] sm:$0xff]
        %v684 = vld [vmem:[%s395 + $0x70] sm:$0xff]
        %v685 = vld [vmem:[%s395 + $0x78] sm:$0xff]
        %v686 = vld [vmem:[%s395 + $0x80] sm:$0xff]
        %v687 = vld [vmem:[%s395 + $0x88] sm:$0xff]
        %v688 = vld [vmem:[%s395 + $0x90] sm:$0xff]
        %v689 = vld [vmem:[%s395 + $0x98] sm:$0xff]
        %v690 = vld [vmem:[%s395 + $0xa0] sm:$0xff]
        %v691 = vld [vmem:[%s395 + $0xa8] sm:$0xff]
        %v692 = vld [vmem:[%s395 + $0xb0] sm:$0xff]
        %v693 = vld [vmem:[%s395 + $0xb8] sm:$0xff]
        %v694 = vld [vmem:[%s395 + $0xc0] sm:$0xff]
        %v695 = vld [vmem:[%s395 + $0xc8] sm:$0xff]
        %v696 = vld [vmem:[%s395 + $0xd0] sm:$0xff]
        %v697 = vld [vmem:[%s395 + $0xd8] sm:$0xff]
        %v698 = vld [vmem:[%s395 + $0xe0] sm:$0xff]
        %v699 = vld [vmem:[%s395 + $0xe8] sm:$0xff]
        %v700 = vld [vmem:[%s395 + $0xf0] sm:$0xff]
        %v701 = vld [vmem:[%s395 + $0xf8] sm:$0xff]
        %v702 = vld [vmem:[%s400] ss:$4 sm:$0x3]
        %v704 = vperm.slane %v702, 0
        %v705 = vperm.slane %v702, 1
        %708 = vmatpush.msra.mxu0 %v700
        %709 = vmatpush.msra.mxu0 %v698
        %710 = vmatpush.msra.mxu0 %v696
        %711 = vmatpush.msra.mxu0 %v694
        %712 = vmatpush.msra.mxu0 %v692
        %713 = vmatpush.msra.mxu0 %v690
        %714 = vmatpush.msra.mxu0 %v688
        %715 = vmatpush.msra.mxu0 %v686
        %716 = vmatpush.msra.mxu0 %v684
        %717 = vmatpush.msra.mxu0 %v682
        %718 = vmatpush.msra.mxu0 %v680
        %719 = vmatpush.msra.mxu0 %v678
        %720 = vmatpush.msra.mxu0 %v676
        %721 = vmatpush.msra.mxu0 %v674
        %722 = vmatpush.msra.mxu0 %v672
        %723 = vmatpush.msra.mxu0 %v670
        %724 = vmatmul.f32.gmra.mxu0 %v662
        %v725 = vpop.f32.mrf.mxu0
        %v726 = vadd.f32 %v704, %v725
        %727 = vmatmul.f32.gmra.mxu0 %v663
        %v728 = vpop.f32.mrf.mxu0
        %v729 = vadd.f32 %v704, %v728
        %730 = vmatmul.f32.gmra.mxu0 %v664
        %v731 = vpop.f32.mrf.mxu0
        %v732 = vadd.f32 %v704, %v731
        %733 = vmatmul.f32.gmra.mxu0 %v665
        %v734 = vpop.f32.mrf.mxu0
        %v735 = vadd.f32 %v704, %v734
        %736 = vmatmul.f32.gmra.mxu0 %v666
        %v737 = vpop.f32.mrf.mxu0
        %v738 = vadd.f32 %v704, %v737
        %739 = vmatmul.f32.gmra.mxu0 %v667
        %v740 = vpop.f32.mrf.mxu0
        %v741 = vadd.f32 %v704, %v740
        %742 = vmatmul.f32.gmra.mxu0 %v668
        %v743 = vpop.f32.mrf.mxu0
        %v744 = vadd.f32 %v704, %v743
        %745 = vmatmul.f32.gmra.mxu0 %v669
        %v746 = vpop.f32.mrf.mxu0
        %v747 = vadd.f32 %v704, %v746
        %748 = vdwg.mxu0
        %749 = vmatpush.msra.mxu0 %v701
        %750 = vmatpush.msra.mxu0 %v699
        %751 = vmatpush.msra.mxu0 %v697
        %752 = vmatpush.msra.mxu0 %v695
        %753 = vmatpush.msra.mxu0 %v693
        %754 = vmatpush.msra.mxu0 %v691
        %755 = vmatpush.msra.mxu0 %v689
        %756 = vmatpush.msra.mxu0 %v687
        %757 = vmatpush.msra.mxu0 %v685
        %758 = vmatpush.msra.mxu0 %v683
        %759 = vmatpush.msra.mxu0 %v681
        %760 = vmatpush.msra.mxu0 %v679
        %761 = vmatpush.msra.mxu0 %v677
        %762 = vmatpush.msra.mxu0 %v675
        %763 = vmatpush.msra.mxu0 %v673
        %764 = vmatpush.msra.mxu0 %v671
        %765 = vmatmul.f32.gmra.mxu0 %v662
        %v766 = vpop.f32.mrf.mxu0
        %v767 = vadd.f32 %v705, %v766
        %768 = vmatmul.f32.gmra.mxu0 %v663
        %v769 = vpop.f32.mrf.mxu0
        %v770 = vadd.f32 %v705, %v769
        %771 = vmatmul.f32.gmra.mxu0 %v664
        %v772 = vpop.f32.mrf.mxu0
        %v773 = vadd.f32 %v705, %v772
        %774 = vmatmul.f32.gmra.mxu0 %v665
        %v775 = vpop.f32.mrf.mxu0
        %v776 = vadd.f32 %v705, %v775
        %777 = vmatmul.f32.gmra.mxu0 %v666
        %v778 = vpop.f32.mrf.mxu0
        %v779 = vadd.f32 %v705, %v778
        %780 = vmatmul.f32.gmra.mxu0 %v667
        %v781 = vpop.f32.mrf.mxu0
        %v782 = vadd.f32 %v705, %v781
        %783 = vmatmul.f32.gmra.mxu0 %v668
        %v784 = vpop.f32.mrf.mxu0
        %v785 = vadd.f32 %v705, %v784
        %786 = vmatmul.f32.gmra.mxu0 %v669
        %v787 = vpop.f32.mrf.mxu0
        %v788 = vadd.f32 %v705, %v787
        %789 = vdwg.mxu0
        %v791 = vsel %vm471, 1.0, 0
        %793 = vmatpush.msra.mxu0 0.0
        %794 = vmatpush.msra.mxu0 0.0
        %795 = vmatpush.msra.mxu0 0.0
        %796 = vmatpush.msra.mxu0 0.0
        %797 = vmatpush.msra.mxu0 0.0
        %798 = vmatpush.msra.mxu0 0.0
        %799 = vmatpush.msra.mxu0 0.0
        %800 = vmatpush.msra.mxu0 0.0
        %801 = vmatpush.msra.mxu0 %v747
        %802 = vmatpush.msra.mxu0 %v744
        %803 = vmatpush.msra.mxu0 %v741
        %804 = vmatpush.msra.mxu0 %v738
        %805 = vmatpush.msra.mxu0 %v735
        %806 = vmatpush.msra.mxu0 %v732
        %807 = vmatpush.msra.mxu0 %v729
        %808 = vmatpush.msra.mxu0 %v726
        %809 = vmatmul.f32.gmra.mxu0 %v791
        %v810 = vpop.f32.mrf.mxu0
        %v811 = vadd.f32 0.0, %v810
        %812 = vdwg.mxu0
        %813 = vmatpush.msra.mxu0 0.0
        %814 = vmatpush.msra.mxu0 0.0
        %815 = vmatpush.msra.mxu0 0.0
        %816 = vmatpush.msra.mxu0 0.0
        %817 = vmatpush.msra.mxu0 0.0
        %818 = vmatpush.msra.mxu0 0.0
        %819 = vmatpush.msra.mxu0 0.0
        %820 = vmatpush.msra.mxu0 0.0
        %821 = vmatpush.msra.mxu0 %v788
        %822 = vmatpush.msra.mxu0 %v785
        %823 = vmatpush.msra.mxu0 %v782
        %824 = vmatpush.msra.mxu0 %v779
        %825 = vmatpush.msra.mxu0 %v776
        %826 = vmatpush.msra.mxu0 %v773
        %827 = vmatpush.msra.mxu0 %v770
        %828 = vmatpush.msra.mxu0 %v767
        %829 = vmatmul.f32.gmra.mxu0 %v791
        %v830 = vpop.f32.mrf.mxu0
        %v831 = vadd.f32 0.0, %v830
        %832 = vdwg.mxu0
        %v833 = vmul.f32 %v811, 0.015625
        %v834 = vmul.f32 %v831, 0.015625
        %v835 = vperm.slane %v833, 0
        %v836 = vperm.slane %v834, 0
        %v837 = vsub.f32 %v726, %v835
        %v838 = vsub.f32 %v767, %v836
        %v839 = vsub.f32 %v729, %v835
        %v840 = vsub.f32 %v770, %v836
        %v841 = vsub.f32 %v732, %v835
        %v842 = vsub.f32 %v773, %v836
        %v843 = vsub.f32 %v735, %v835
        %v844 = vsub.f32 %v776, %v836
        %v845 = vsub.f32 %v738, %v835
        %v846 = vsub.f32 %v779, %v836
        %v847 = vsub.f32 %v741, %v835
        %v848 = vsub.f32 %v782, %v836
        %v849 = vsub.f32 %v744, %v835
        %v850 = vsub.f32 %v785, %v836
        %v851 = vsub.f32 %v747, %v835
        %v852 = vsub.f32 %v788, %v836
        %v853 = vmul.f32 %v837, %v837
        %v854 = vmul.f32 %v838, %v838
        %v855 = vmul.f32 %v839, %v839
        %v856 = vmul.f32 %v840, %v840
        %v857 = vmul.f32 %v841, %v841
        %v858 = vmul.f32 %v842, %v842
        %v859 = vmul.f32 %v843, %v843
        %v860 = vmul.f32 %v844, %v844
        %v861 = vmul.f32 %v845, %v845
        %v862 = vmul.f32 %v846, %v846
        %v863 = vmul.f32 %v847, %v847
        %v864 = vmul.f32 %v848, %v848
        %v865 = vmul.f32 %v849, %v849
        %v866 = vmul.f32 %v850, %v850
        %v867 = vmul.f32 %v851, %v851
        %v868 = vmul.f32 %v852, %v852
        %869 = vmatpush.msra.mxu0 0.0
        %870 = vmatpush.msra.mxu0 0.0
        %871 = vmatpush.msra.mxu0 0.0
        %872 = vmatpush.msra.mxu0 0.0
        %873 = vmatpush.msra.mxu0 0.0
        %874 = vmatpush.msra.mxu0 0.0
        %875 = vmatpush.msra.mxu0 0.0
        %876 = vmatpush.msra.mxu0 0.0
        %877 = vmatpush.msra.mxu0 %v867
        %878 = vmatpush.msra.mxu0 %v865
        %879 = vmatpush.msra.mxu0 %v863
        %880 = vmatpush.msra.mxu0 %v861
        %881 = vmatpush.msra.mxu0 %v859
        %882 = vmatpush.msra.mxu0 %v857
        %883 = vmatpush.msra.mxu0 %v855
        %884 = vmatpush.msra.mxu0 %v853
        %885 = vmatmul.f32.gmra.mxu0 %v791
        %v886 = vpop.f32.mrf.mxu0
        %v887 = vadd.f32 0.0, %v886
        %888 = vdwg.mxu0
        %889 = vmatpush.msra.mxu0 0.0
        %890 = vmatpush.msra.mxu0 0.0
        %891 = vmatpush.msra.mxu0 0.0
        %892 = vmatpush.msra.mxu0 0.0
        %893 = vmatpush.msra.mxu0 0.0
        %894 = vmatpush.msra.mxu0 0.0
        %895 = vmatpush.msra.mxu0 0.0
        %896 = vmatpush.msra.mxu0 0.0
        %897 = vmatpush.msra.mxu0 %v868
        %898 = vmatpush.msra.mxu0 %v866
        %899 = vmatpush.msra.mxu0 %v864
        %900 = vmatpush.msra.mxu0 %v862
        %901 = vmatpush.msra.mxu0 %v860
        %902 = vmatpush.msra.mxu0 %v858
        %903 = vmatpush.msra.mxu0 %v856
        %904 = vmatpush.msra.mxu0 %v854
        %905 = vmatmul.f32.gmra.mxu0 %v791
        %v906 = vpop.f32.mrf.mxu0
        %v907 = vadd.f32 0.0, %v906
        %908 = vdwg.mxu0
        %v909 = vmul.f32 %v887, 0.015625
        %v910 = vmul.f32 %v907, 0.015625
        %v911 = vadd.f32 %v909, 1e-05
        %v912 = vadd.f32 %v910, 1e-05
        %v913 = vrsqrt.pop %v911
        %v914 = vmul.f32 %v913, %v911
        %v915 = vmul.f32 %v914, %v913
        %v916 = vmul.f32 0.5, %v915
        %v917 = vsub.f32 1.5, %v916
        %v918 = vmul.f32 %v913, %v917
        %vm919 = vweird.f32 %v911
        %vm920 = vweird.f32 %v913
        %vm921 = vmor %vm919, %vm920
        %v922 = vsel %vm921, %v913, %v918
        %v923 = vrsqrt.pop %v912
        %v924 = vmul.f32 %v923, %v912
        %v925 = vmul.f32 %v924, %v923
        %v926 = vmul.f32 0.5, %v925
        %v927 = vsub.f32 1.5, %v926
        %v928 = vmul.f32 %v923, %v927
        %vm929 = vweird.f32 %v912
        %vm930 = vweird.f32 %v923
        %vm931 = vmor %vm929, %vm930
        %v932 = vsel %vm931, %v923, %v928
        %v933 = vperm.slane %v922, 0
        %v934 = vperm.slane %v932, 0
        %v935 = vmul.f32 %v837, %v933
        %v936 = vmul.f32 %v838, %v934
        %v937 = vmul.f32 %v839, %v933
        %v938 = vmul.f32 %v840, %v934
        %v939 = vmul.f32 %v841, %v933
        %v940 = vmul.f32 %v842, %v934
        %v941 = vmul.f32 %v843, %v933
        %v942 = vmul.f32 %v844, %v934
        %v943 = vmul.f32 %v845, %v933
        %v944 = vmul.f32 %v846, %v934
        %v945 = vmul.f32 %v847, %v933
        %v946 = vmul.f32 %v848, %v934
        %v947 = vmul.f32 %v849, %v933
        %v948 = vmul.f32 %v850, %v934
        %v949 = vmul.f32 %v851, %v933
        %v950 = vmul.f32 %v852, %v934
        %s951 = scalar_lea.vmem %s400, 1
        %v952 = vld [vmem:[%s951] ss:$4 sm:$0x3]
        %v954 = vperm.slane %v952, 0
        %v955 = vperm.slane %v952, 1
        %v958 = vmul.f32 %v935, %v954
        %v959 = vmul.f32 %v936, %v955
        %v960 = vmul.f32 %v937, %v954
        %v961 = vmul.f32 %v938, %v955
        %v962 = vmul.f32 %v939, %v954
        %v963 = vmul.f32 %v940, %v955
        %v964 = vmul.f32 %v941, %v954
        %v965 = vmul.f32 %v942, %v955
        %v966 = vmul.f32 %v943, %v954
        %v967 = vmul.f32 %v944, %v955
        %v968 = vmul.f32 %v945, %v954
        %v969 = vmul.f32 %v946, %v955
        %v970 = vmul.f32 %v947, %v954
        %v971 = vmul.f32 %v948, %v955
        %v972 = vmul.f32 %v949, %v954
        %v973 = vmul.f32 %v950, %v955
        %s974 = scalar_lea.vmem %s400, 2
        %v975 = vld [vmem:[%s974] ss:$4 sm:$0x3]
        %v977 = vperm.slane %v975, 0
        %v978 = vperm.slane %v975, 1
        %v981 = vadd.f32 %v958, %v977
        %v982 = vadd.f32 %v959, %v978
        %v983 = vadd.f32 %v960, %v977
        %v984 = vadd.f32 %v961, %v978
        %v985 = vadd.f32 %v962, %v977
        %v986 = vadd.f32 %v963, %v978
        %v987 = vadd.f32 %v964, %v977
        %v988 = vadd.f32 %v965, %v978
        %v989 = vadd.f32 %v966, %v977
        %v990 = vadd.f32 %v967, %v978
        %v991 = vadd.f32 %v968, %v977
        %v992 = vadd.f32 %v969, %v978
        %v993 = vadd.f32 %v970, %v977
        %v994 = vadd.f32 %v971, %v978
        %v995 = vadd.f32 %v972, %v977
        %v996 = vadd.f32 %v973, %v978
        %v997 = vmax.f32 %v981, 0.0
        %v998 = vmax.f32 %v982, 0.0
        %v999 = vmax.f32 %v983, 0.0
        %v1000 = vmax.f32 %v984, 0.0
        %v1001 = vmax.f32 %v985, 0.0
        %v1002 = vmax.f32 %v986, 0.0
        %v1003 = vmax.f32 %v987, 0.0
        %v1004 = vmax.f32 %v988, 0.0
        %v1005 = vmax.f32 %v989, 0.0
        %v1006 = vmax.f32 %v990, 0.0
        %v1007 = vmax.f32 %v991, 0.0
        %v1008 = vmax.f32 %v992, 0.0
        %v1009 = vmax.f32 %v993, 0.0
        %v1010 = vmax.f32 %v994, 0.0
        %v1011 = vmax.f32 %v995, 0.0
        %v1012 = vmax.f32 %v996, 0.0
        %v1013 = vld [vmem:[%s405] sm:$0xff]
        %v1014 = vld [vmem:[%s405 + $0x8] sm:$0xff]
        %v1015 = vld [vmem:[%s405 + $0x10] sm:$0xff]
        %v1016 = vld [vmem:[%s405 + $0x18] sm:$0xff]
        %v1017 = vld [vmem:[%s405 + $0x20] sm:$0xff]
        %v1018 = vld [vmem:[%s405 + $0x28] sm:$0xff]
        %v1019 = vld [vmem:[%s405 + $0x30] sm:$0xff]
        %v1020 = vld [vmem:[%s405 + $0x38] sm:$0xff]
        %v1021 = vld [vmem:[%s405 + $0x40] sm:$0xff]
        %v1022 = vld [vmem:[%s405 + $0x48] sm:$0xff]
        %v1023 = vld [vmem:[%s405 + $0x50] sm:$0xff]
        %v1024 = vld [vmem:[%s405 + $0x58] sm:$0xff]
        %v1025 = vld [vmem:[%s405 + $0x60] sm:$0xff]
        %v1026 = vld [vmem:[%s405 + $0x68] sm:$0xff]
        %v1027 = vld [vmem:[%s405 + $0x70] sm:$0xff]
        %v1028 = vld [vmem:[%s405 + $0x78] sm:$0xff]
        %v1029 = vld [vmem:[%s405 + $0x80] sm:$0xff]
        %v1030 = vld [vmem:[%s405 + $0x88] sm:$0xff]
        %v1031 = vld [vmem:[%s405 + $0x90] sm:$0xff]
        %v1032 = vld [vmem:[%s405 + $0x98] sm:$0xff]
        %v1033 = vld [vmem:[%s405 + $0xa0] sm:$0xff]
        %v1034 = vld [vmem:[%s405 + $0xa8] sm:$0xff]
        %v1035 = vld [vmem:[%s405 + $0xb0] sm:$0xff]
        %v1036 = vld [vmem:[%s405 + $0xb8] sm:$0xff]
        %v1037 = vld [vmem:[%s405 + $0xc0] sm:$0xff]
        %v1038 = vld [vmem:[%s405 + $0xc8] sm:$0xff]
        %v1039 = vld [vmem:[%s405 + $0xd0] sm:$0xff]
        %v1040 = vld [vmem:[%s405 + $0xd8] sm:$0xff]
        %v1041 = vld [vmem:[%s405 + $0xe0] sm:$0xff]
        %v1042 = vld [vmem:[%s405 + $0xe8] sm:$0xff]
        %v1043 = vld [vmem:[%s405 + $0xf0] sm:$0xff]
        %v1044 = vld [vmem:[%s405 + $0xf8] sm:$0xff]
        %v1045 = vld [vmem:[%s409] sm:$0x1]
        %v1046 = vperm.slane %v1045, 0
        %1047 = vmatpush.msra.mxu0 %v1028
        %1048 = vmatpush.msra.mxu0 %v1027
        %1049 = vmatpush.msra.mxu0 %v1026
        %1050 = vmatpush.msra.mxu0 %v1025
        %1051 = vmatpush.msra.mxu0 %v1024
        %1052 = vmatpush.msra.mxu0 %v1023
        %1053 = vmatpush.msra.mxu0 %v1022
        %1054 = vmatpush.msra.mxu0 %v1021
        %1055 = vmatpush.msra.mxu0 %v1020
        %1056 = vmatpush.msra.mxu0 %v1019
        %1057 = vmatpush.msra.mxu0 %v1018
        %1058 = vmatpush.msra.mxu0 %v1017
        %1059 = vmatpush.msra.mxu0 %v1016
        %1060 = vmatpush.msra.mxu0 %v1015
        %1061 = vmatpush.msra.mxu0 %v1014
        %1062 = vmatpush.msra.mxu0 %v1013
        %1063 = vmatmul.f32.gmra.mxu0 %v997
        %v1064 = vpop.f32.mrf.mxu0
        %v1065 = vadd.f32 %v1046, %v1064
        %1066 = vmatmul.f32.gmra.mxu0 %v999
        %v1067 = vpop.f32.mrf.mxu0
        %v1068 = vadd.f32 %v1046, %v1067
        %1069 = vmatmul.f32.gmra.mxu0 %v1001
        %v1070 = vpop.f32.mrf.mxu0
        %v1071 = vadd.f32 %v1046, %v1070
        %1072 = vmatmul.f32.gmra.mxu0 %v1003
        %v1073 = vpop.f32.mrf.mxu0
        %v1074 = vadd.f32 %v1046, %v1073
        %1075 = vmatmul.f32.gmra.mxu0 %v1005
        %v1076 = vpop.f32.mrf.mxu0
        %v1077 = vadd.f32 %v1046, %v1076
        %1078 = vmatmul.f32.gmra.mxu0 %v1007
        %v1079 = vpop.f32.mrf.mxu0
        %v1080 = vadd.f32 %v1046, %v1079
        %1081 = vmatmul.f32.gmra.mxu0 %v1009
        %v1082 = vpop.f32.mrf.mxu0
        %v1083 = vadd.f32 %v1046, %v1082
        %1084 = vmatmul.f32.gmra.mxu0 %v1011
        %v1085 = vpop.f32.mrf.mxu0
        %v1086 = vadd.f32 %v1046, %v1085
        %1087 = vdwg.mxu0
        %1088 = vmatpush.msra.mxu0 %v1044
        %1089 = vmatpush.msra.mxu0 %v1043
        %1090 = vmatpush.msra.mxu0 %v1042
        %1091 = vmatpush.msra.mxu0 %v1041
        %1092 = vmatpush.msra.mxu0 %v1040
        %1093 = vmatpush.msra.mxu0 %v1039
        %1094 = vmatpush.msra.mxu0 %v1038
        %1095 = vmatpush.msra.mxu0 %v1037
        %1096 = vmatpush.msra.mxu0 %v1036
        %1097 = vmatpush.msra.mxu0 %v1035
        %1098 = vmatpush.msra.mxu0 %v1034
        %1099 = vmatpush.msra.mxu0 %v1033
        %1100 = vmatpush.msra.mxu0 %v1032
        %1101 = vmatpush.msra.mxu0 %v1031
        %1102 = vmatpush.msra.mxu0 %v1030
        %1103 = vmatpush.msra.mxu0 %v1029
        %1104 = vmatmul.f32.gmra.mxu0 %v998
        %v1105 = vpop.f32.mrf.mxu0
        %v1106 = vadd.f32 %v1065, %v1105
        %1107 = vmatmul.f32.gmra.mxu0 %v1000
        %v1108 = vpop.f32.mrf.mxu0
        %v1109 = vadd.f32 %v1068, %v1108
        %1110 = vmatmul.f32.gmra.mxu0 %v1002
        %v1111 = vpop.f32.mrf.mxu0
        %v1112 = vadd.f32 %v1071, %v1111
        %1113 = vmatmul.f32.gmra.mxu0 %v1004
        %v1114 = vpop.f32.mrf.mxu0
        %v1115 = vadd.f32 %v1074, %v1114
        %1116 = vmatmul.f32.gmra.mxu0 %v1006
        %v1117 = vpop.f32.mrf.mxu0
        %v1118 = vadd.f32 %v1077, %v1117
        %1119 = vmatmul.f32.gmra.mxu0 %v1008
        %v1120 = vpop.f32.mrf.mxu0
        %v1121 = vadd.f32 %v1080, %v1120
        %1122 = vmatmul.f32.gmra.mxu0 %v1010
        %v1123 = vpop.f32.mrf.mxu0
        %v1124 = vadd.f32 %v1083, %v1123
        %1125 = vmatmul.f32.gmra.mxu0 %v1012
        %v1126 = vpop.f32.mrf.mxu0
        %v1127 = vadd.f32 %v1086, %v1126
        %1128 = vdwg.mxu0
        %1129 = vmatpush.msra.mxu0 0.0
        %1130 = vmatpush.msra.mxu0 0.0
        %1131 = vmatpush.msra.mxu0 0.0
        %1132 = vmatpush.msra.mxu0 0.0
        %1133 = vmatpush.msra.mxu0 0.0
        %1134 = vmatpush.msra.mxu0 0.0
        %1135 = vmatpush.msra.mxu0 0.0
        %1136 = vmatpush.msra.mxu0 0.0
        %1137 = vmatpush.msra.mxu0 %v1127
        %1138 = vmatpush.msra.mxu0 %v1124
        %1139 = vmatpush.msra.mxu0 %v1121
        %1140 = vmatpush.msra.mxu0 %v1118
        %1141 = vmatpush.msra.mxu0 %v1115
        %1142 = vmatpush.msra.mxu0 %v1112
        %1143 = vmatpush.msra.mxu0 %v1109
        %1144 = vmatpush.msra.mxu0 %v1106
        %1145 = vmatmul.f32.gmra.mxu0 %v791
        %v1146 = vpop.f32.mrf.mxu0
        %v1147 = vadd.f32 0.0, %v1146
        %1148 = vdwg.mxu0
        %v1149 = vmul.f32 %v1147, 0.015625
        %v1150 = vperm.slane %v1149, 0
        %v1151 = vsub.f32 %v1106, %v1150
        %v1152 = vsub.f32 %v1109, %v1150
        %v1153 = vsub.f32 %v1112, %v1150
        %v1154 = vsub.f32 %v1115, %v1150
        %v1155 = vsub.f32 %v1118, %v1150
        %v1156 = vsub.f32 %v1121, %v1150
        %v1157 = vsub.f32 %v1124, %v1150
        %v1158 = vsub.f32 %v1127, %v1150
        %v1159 = vmul.f32 %v1151, %v1151
        %v1160 = vmul.f32 %v1152, %v1152
        %v1161 = vmul.f32 %v1153, %v1153
        %v1162 = vmul.f32 %v1154, %v1154
        %v1163 = vmul.f32 %v1155, %v1155
        %v1164 = vmul.f32 %v1156, %v1156
        %v1165 = vmul.f32 %v1157, %v1157
        %v1166 = vmul.f32 %v1158, %v1158
        %1167 = vmatpush.msra.mxu0 0.0
        %1168 = vmatpush.msra.mxu0 0.0
        %1169 = vmatpush.msra.mxu0 0.0
        %1170 = vmatpush.msra.mxu0 0.0
        %1171 = vmatpush.msra.mxu0 0.0
        %1172 = vmatpush.msra.mxu0 0.0
        %1173 = vmatpush.msra.mxu0 0.0
        %1174 = vmatpush.msra.mxu0 0.0
        %1175 = vmatpush.msra.mxu0 %v1166
        %1176 = vmatpush.msra.mxu0 %v1165
        %1177 = vmatpush.msra.mxu0 %v1164
        %1178 = vmatpush.msra.mxu0 %v1163
        %1179 = vmatpush.msra.mxu0 %v1162
        %1180 = vmatpush.msra.mxu0 %v1161
        %1181 = vmatpush.msra.mxu0 %v1160
        %1182 = vmatpush.msra.mxu0 %v1159
        %1183 = vmatmul.f32.gmra.mxu0 %v791
        %v1184 = vpop.f32.mrf.mxu0
        %v1185 = vadd.f32 0.0, %v1184
        %1186 = vdwg.mxu0
        %v1187 = vmul.f32 %v1185, 0.015625
        %v1188 = vadd.f32 %v1187, 1e-05
        %v1189 = vrsqrt.pop %v1188
        %v1190 = vmul.f32 %v1189, %v1188
        %v1191 = vmul.f32 %v1190, %v1189
        %v1192 = vmul.f32 0.5, %v1191
        %v1193 = vsub.f32 1.5, %v1192
        %v1194 = vmul.f32 %v1189, %v1193
        %vm1195 = vweird.f32 %v1188
        %vm1196 = vweird.f32 %v1189
        %vm1197 = vmor %vm1195, %vm1196
        %v1198 = vsel %vm1197, %v1189, %v1194
        %v1199 = vperm.slane %v1198, 0
        %v1200 = vmul.f32 %v1151, %v1199
        %v1201 = vmul.f32 %v1152, %v1199
        %v1202 = vmul.f32 %v1153, %v1199
        %v1203 = vmul.f32 %v1154, %v1199
        %v1204 = vmul.f32 %v1155, %v1199
        %v1205 = vmul.f32 %v1156, %v1199
        %v1206 = vmul.f32 %v1157, %v1199
        %v1207 = vmul.f32 %v1158, %v1199
        %v1208 = vld [vmem:[%s409 + $0x1] sm:$0x1]
        %v1209 = vperm.slane %v1208, 0
        %v1210 = vmul.f32 %v1200, %v1209
        %v1211 = vmul.f32 %v1201, %v1209
        %v1212 = vmul.f32 %v1202, %v1209
        %v1213 = vmul.f32 %v1203, %v1209
        %v1214 = vmul.f32 %v1204, %v1209
        %v1215 = vmul.f32 %v1205, %v1209
        %v1216 = vmul.f32 %v1206, %v1209
        %v1217 = vmul.f32 %v1207, %v1209
        %v1218 = vld [vmem:[%s409 + $0x2] sm:$0x1]
        %v1219 = vperm.slane %v1218, 0
        %v1220 = vadd.f32 %v1210, %v1219
        %v1221 = vadd.f32 %v1211, %v1219
        %v1222 = vadd.f32 %v1212, %v1219
        %v1223 = vadd.f32 %v1213, %v1219
        %v1224 = vadd.f32 %v1214, %v1219
        %v1225 = vadd.f32 %v1215, %v1219
        %v1226 = vadd.f32 %v1216, %v1219
        %v1227 = vadd.f32 %v1217, %v1219
        %p1228 = scmp.ne.s32.totalorder %s22, 2
        // Predicated region
        $region65: #{gnn_forward.1} parent=55 // pred_check
          %p1229 = pneg %p1228
        $region66: #{gnn_forward.1} parent=55 // pred_check_branch
          %1231 = sbr.rel (%p1229) target = $region68
        $region67: #{gnn_forward.1} parent=55 // pred_region
          %v1232 = vmax.f32 %v1220, 0.0
          %v1233 = vmax.f32 %v1221, 0.0
          %v1234 = vmax.f32 %v1222, 0.0
          %v1235 = vmax.f32 %v1223, 0.0
          %v1236 = vmax.f32 %v1224, 0.0
          %v1237 = vmax.f32 %v1225, 0.0
          %v1238 = vmax.f32 %v1226, 0.0
          %v1239 = vmax.f32 %v1227, 0.0
          %1240 = vst [vmem:[#allocation5] sm:$0xff] %v1232
          %1241 = vst [vmem:[#allocation5 + $0x8] sm:$0xff] %v1233
          %1242 = vst [vmem:[#allocation5 + $0x10] sm:$0xff] %v1234
          %1243 = vst [vmem:[#allocation5 + $0x18] sm:$0xff] %v1235
          %1244 = vst [vmem:[#allocation5 + $0x20] sm:$0xff] %v1236
          %1245 = vst [vmem:[#allocation5 + $0x28] sm:$0xff] %v1237
          %1246 = vst [vmem:[#allocation5 + $0x30] sm:$0xff] %v1238
          %1247 = vst [vmem:[#allocation5 + $0x38] sm:$0xff] %v1239
        $region68: #{gnn_forward.1} parent=55 // pred_fallthru
          _
        // Predicated region
        $region69: #{gnn_forward.1} parent=55 // pred_check
          %p1248 = pneg %p410
        $region70: #{gnn_forward.1} parent=55 // pred_check_branch
          %1250 = sbr.rel (%p1248) target = $region72
        $region71: #{gnn_forward.1} parent=55 // pred_region
          %1251 = vst [vmem:[#allocation5] sm:$0xff] %v1220
          %1252 = vst [vmem:[#allocation5 + $0x8] sm:$0xff] %v1221
          %1253 = vst [vmem:[#allocation5 + $0x10] sm:$0xff] %v1222
          %1254 = vst [vmem:[#allocation5 + $0x18] sm:$0xff] %v1223
          %1255 = vst [vmem:[#allocation5 + $0x20] sm:$0xff] %v1224
          %1256 = vst [vmem:[#allocation5 + $0x28] sm:$0xff] %v1225
          %1257 = vst [vmem:[#allocation5 + $0x30] sm:$0xff] %v1226
          %1258 = vst [vmem:[#allocation5 + $0x38] sm:$0xff] %v1227
        $region72: #{gnn_forward.1} parent=55 // pred_fallthru
          _
        // Predicated region
        $region73: #{gnn_forward.1} parent=55 // pred_check
          %p1259 = pneg %p249
        $region74: #{gnn_forward.1} parent=55 // pred_check_branch
          %1261 = sbr.rel (%p1259) target = $region76
        $region75: #{gnn_forward.1} parent=55 // pred_region
          %1263 = vsyncadd [#allocation3], 0
          %s1264 = sshll.u32 [#allocation5], 4
          %s1265 = int_to_ptr.vmem [resolvable:$true] %s1264
          %s1266 = sshll.u32 %s9, 4
          %s1267 = int_to_ptr.hbm [resolvable:$true] %s1266
          %1272 = dma.vmem_to_hbm [thread:$0]  %s1265, 1024, %s1267, [#allocation3], 128, 128, 8
        $region76: #{gnn_forward.1} parent=55 // pred_fallthru
          _
        // Predicated region
        $region77: #{gnn_forward.1} parent=55 // pred_check
          %p1273 = pneg %p249
        $region78: #{gnn_forward.1} parent=55 // pred_check_branch
          %1275 = sbr.rel (%p1273) target = $region80
        $region79: #{gnn_forward.1} parent=55 // pred_region
          %1277 = dma.done [#allocation3], 1024
        $region80: #{gnn_forward.1} parent=55 // pred_fallthru
          _
      $region56: #{gnn_forward.1} parent=5 // pred_fallthru
        _
      %p1278 = scmp.le.s32.totalorder 2, %s17
      // Predicated region
      $region81: #{gnn_forward.1} parent=5 // pred_check
        %p1279 = pneg %p1278
      $region82: #{gnn_forward.1} parent=5 // pred_check_branch
        %1281 = sbr.rel (%p1279) target = $region84
      $region83: #{gnn_forward.1} parent=5 // pred_region
        %s1282 = ssub.s32 %s17, 2
      $region84: #{gnn_forward.1} parent=5 // pred_fallthru
        _
    $region6: #{gnn_forward.1} parent=1 // loop_footer
      %s21 = sadd.s32 1, %s17
    $region7: #{gnn_forward.1} parent=1 // loop_footer_branch
      %16 = sbr.rel target = $region3
    $region8: #{gnn_forward.1} parent=1 // loop_exit
      _
    %1283 = vsyncpa [#allocation3], 1
    %s1284 = scalar_lea.sflag [#allocation3], 1
    %1285 = vsyncpa %s1284, 1
    %1286 = vsyncpa [#allocation4], 1
    %s1287 = scalar_lea.sflag [#allocation4], 1
    %1288 = vsyncpa %s1287, 1

</llo_original>
